<compile_context>
chip_gen: v7x
topology: tpu7x:2x2x1
jax: 0.10.0
libtpu: 0.0.40
codegen_flags: <defaults>
</compile_context>

<pallas_src>
import functools

import jax
import jax.numpy as jnp
import numpy as np
from jax.experimental import pallas as pl
from jax.experimental.pallas import tpu as pltpu


def _cbam_kernel(x_ref, w1t_ref, w2_ref, coef_ref, o_ref, pooled_ref, *, bb, shifts):
    """x_ref/o_ref: (bb, C, HW); w1t/w2: (C, Cr); coef: (k*k, 2*bb, HW); pooled: (2*bb, HW)."""
    w1t = w1t_ref[...]                                   # (C, Cr) f32
    w2 = w2_ref[...]                                     # (C, Cr) f32
    C = w1t.shape[0]
    HW = pooled_ref.shape[1]
    inv_hw = 1.0 / HW
    inv_c = 1.0 / C

    def excite(v):                                       # v: (C, 1) f32
        # fc1 (no bias): h[r] = sum_c W1[r, c] * v[c] -> (1, Cr); relu
        h = jnp.maximum(jnp.sum(w1t * v, axis=0, keepdims=True), 0.0)
        # fc2 (no bias): s[c] = sum_r W2[c, r] * h[r] -> (C, 1)
        return jnp.sum(w2 * h, axis=1, keepdims=True)

    # ---- Pass 1: channel attention per batch element; stash fp in the output buffer
    # and the channel-pooled maps into the stacked (2*bb, HW) slab. -------------------
    def pass1(bi, carry):
        x = x_ref[bi]                                    # (C, HW), I/O dtype, lane-dense
        avg_c = jnp.sum(x, axis=1, keepdims=True, dtype=jnp.float32) * inv_hw   # (C, 1)
        max_c = jnp.max(x, axis=1, keepdims=True).astype(jnp.float32)           # (C, 1)
        chan = jax.nn.sigmoid(excite(avg_c) + excite(max_c))                    # (C, 1)
        fp = x * chan.astype(x.dtype)                    # (C, HW), stays in I/O dtype
        o_ref[bi] = fp                                   # stash fp (read back in pass 2)
        pooled_ref[pl.ds(bi, 1), :] = (
            jnp.sum(fp, axis=0, keepdims=True, dtype=jnp.float32) * inv_c)      # avg rows
        pooled_ref[pl.ds(bb + bi, 1), :] = (
            jnp.max(fp, axis=0, keepdims=True).astype(jnp.float32))             # max rows
        return carry

    jax.lax.fori_loop(0, bb, pass1, 0, unroll=True)

    # ---- Spatial conv: one roll + one FMA per tap on the stacked slab. --------------
    pooled = pooled_ref[...]                             # (2*bb, HW) f32
    conv = jnp.zeros((2 * bb, HW), jnp.float32)
    for idx, sh in enumerate(shifts):                    # static k*k unrolled tap loop
        rolled = pooled if sh == 0 else pltpu.roll(pooled, sh, axis=1)
        conv = conv + coef_ref[idx] * rolled             # coef = weight * zero-pad mask

    spat = jax.nn.sigmoid(conv[:bb] + conv[bb:])         # (bb, HW): avg-half + max-half
    pooled_ref[pl.ds(0, bb), :] = spat                   # reuse scratch for the gate

    # ---- Pass 2: scale fp by the spatial gate. ---------------------------------------
    def pass2(bi, carry):
        s = pooled_ref[pl.ds(bi, 1), :]                  # (1, HW) f32
        o_ref[bi] = o_ref[bi] * s.astype(o_ref.dtype)
        return carry

    jax.lax.fori_loop(0, bb, pass2, 0, unroll=True)


def cbam(x_nchw, w1, w2, wconv):
    """CBAM forward.

    x_nchw: (B, C, H, W)
    w1:     (Cr, C, 1, 1)  ChannelAttention.fc1 weight (Conv2d, no bias)
    w2:     (C, Cr, 1, 1)  ChannelAttention.fc2 weight (Conv2d, no bias)
    wconv:  (1, 2, k, k)   SpatialAttention.conv weight (Conv2d, no bias)
    """
    B, C, H, W = x_nchw.shape
    Cr = w1.shape[0]
    k = wconv.shape[-1]
    p = (k - 1) // 2
    HW = H * W
    KK = k * k
    dtype = x_nchw.dtype

    # Free view: NCHW -> (B, C, HW). No transpose, no extra HBM traffic.
    x = x_nchw.reshape(B, C, HW)

    # Small weights, f32 for the in-kernel accumulation.
    w1t = w1.reshape(Cr, C).T.astype(jnp.float32)        # (C, Cr)
    w2m = w2.reshape(C, Cr).astype(jnp.float32)          # (C, Cr)

    # Static per-tap zero-padding validity masks + roll shifts (numpy, trace-time).
    rows = np.repeat(np.arange(H), W)                    # (HW,)
    cols = np.tile(np.arange(W), H)                      # (HW,)
    masks, shifts = [], []
    for ky in range(k):
        for kx in range(k):
            dy, dx = ky - p, kx - p
            valid = ((rows + dy >= 0) & (rows + dy < H) &
                     (cols + dx >= 0) & (cols + dx < W)).astype(np.float32)
            masks.append(valid)
            shifts.append(int((-(dy * W + dx)) % HW))    # jnp.roll convention
    masks_np = np.stack(masks)                           # (KK, HW)

    # ---- batch-block (bb) selection --------------------------------------------------
    # Keep >= 2 grid steps (v7x megacore + pipelining), cap bb at 8 (sublane fill), and
    # budget the full per-step footprint (double-buffered in+out, coef slab, f32
    # intermediates) under 10 MiB so it fits every generation's scoped VMEM.
    itemsize = jnp.dtype(dtype).itemsize
    budget = 10 * 1024 * 1024
    bb = 1
    for cand in range(1, min(B, 8) + 1):
        if B % cand != 0:
            continue
        if B >= 2 and B // cand < 2:
            continue
        blk = cand * C * HW * itemsize                   # one x block == one out block
        coef_bytes = KK * 2 * cand * HW * 4
        inter = 4 * (2 * cand * HW * 4) + 2 * C * HW * 4  # pooled/conv slabs + (C,HW) f32 temps
        if 4 * blk + coef_bytes + inter <= budget:
            bb = cand
    grid = (B // bb,)

    # Fold conv weight + mask into a per-tap coefficient slab, pre-tiled over the
    # stacked [avg rows; max rows] batch slab, so the tap loop is one vld + one FMA.
    wflat = wconv.reshape(2, KK).astype(jnp.float32)
    masks_j = jnp.asarray(masks_np)                      # (KK, HW)
    coef_avg = wflat[0][:, None] * masks_j               # (KK, HW)
    coef_max = wflat[1][:, None] * masks_j               # (KK, HW)
    coef = jnp.concatenate([
        jnp.broadcast_to(coef_avg[:, None, :], (KK, bb, HW)),
        jnp.broadcast_to(coef_max[:, None, :], (KK, bb, HW)),
    ], axis=1)                                           # (KK, 2*bb, HW)

    kernel = functools.partial(_cbam_kernel, bb=bb, shifts=tuple(shifts))

    out = pl.pallas_call(
        kernel,
        out_shape=jax.ShapeDtypeStruct((B, C, HW), dtype),
        grid_spec=pltpu.PrefetchScalarGridSpec(
            num_scalar_prefetch=0,
            grid=grid,
            in_specs=[
                pl.BlockSpec((bb, C, HW), lambda b: (b, 0, 0)),       # x, lane-dense on HW
                pl.BlockSpec((C, Cr), lambda b: (0, 0)),              # fc1^T (VMEM-resident)
                pl.BlockSpec((C, Cr), lambda b: (0, 0)),              # fc2
                pl.BlockSpec((KK, 2 * bb, HW), lambda b: (0, 0, 0)),  # conv coefficient slab
            ],
            out_specs=pl.BlockSpec((bb, C, HW), lambda b: (b, 0, 0)),
            scratch_shapes=[pltpu.VMEM((2 * bb, HW), jnp.float32)],   # pooled / gate slab
        ),
        compiler_params=pltpu.CompilerParams(
            dimension_semantics=("parallel",),           # shard steps across TCs on v7x
            vmem_limit_bytes=32 * 1024 * 1024,
        ),
    )(x, w1t, w2m, coef)

    return out.reshape(B, C, H, W)                       # free view back to NCHW


def cbam_ref(x, w1, w2, wconv):
    """Pure-JAX reference mirroring the PyTorch CBAM module (NCHW)."""
    B, C, H, W = x.shape
    Cr = w1.shape[0]
    k = wconv.shape[-1]
    p = (k - 1) // 2
    w1m = w1.reshape(Cr, C)
    w2m = w2.reshape(C, Cr)

    avg = jnp.mean(x, axis=(2, 3))                       # (B, C)
    mx = jnp.max(x, axis=(2, 3))                         # (B, C)

    def mlp(v):
        h = jnp.maximum(v @ w1m.T, 0.0)                  # (B, Cr)
        return h @ w2m.T                                 # (B, C)

    chan = jax.nn.sigmoid(mlp(avg) + mlp(mx))            # (B, C)
    fp = x * chan[:, :, None, None]

    avg_sp = jnp.mean(fp, axis=1, keepdims=True)         # (B, 1, H, W)
    max_sp = jnp.max(fp, axis=1, keepdims=True)          # (B, 1, H, W)
    cat = jnp.concatenate([avg_sp, max_sp], axis=1)      # (B, 2, H, W)
    conv = jax.lax.conv_general_dilated(
        cat, wconv, window_strides=(1, 1), padding=[(p, p), (p, p)],
        dimension_numbers=("NCHW", "OIHW", "NCHW"))
    spat = jax.nn.sigmoid(conv)                          # (B, 1, H, W)
    return fp * spat


if __name__ == "__main__":
    B, C, H, W = 2, 32, 16, 16
    reduction_ratio = 16
    kernel_size = 7
    Cr = C // reduction_ratio

    key = jax.random.PRNGKey(0)
    kx, k1, k2, k3 = jax.random.split(key, 4)

    x = jax.random.normal(kx, (B, C, H, W), dtype=jnp.float32)
    # PyTorch Conv2d weight shapes (no biases anywhere in CBAM).
    w1 = jax.random.normal(k1, (Cr, C, 1, 1), dtype=jnp.float32) * 0.3
    w2 = jax.random.normal(k2, (C, Cr, 1, 1), dtype=jnp.float32) * 0.3
    wconv = jax.random.normal(k3, (1, 2, kernel_size, kernel_size), dtype=jnp.float32) * 0.3

    out = jax.block_until_ready(cbam(x, w1, w2, wconv))
    ref = jax.block_until_ready(cbam_ref(x, w1, w2, wconv))

    assert out.shape == (B, C, H, W)
    assert jnp.allclose(out, ref, atol=1e-4, rtol=1e-4), "mismatch vs reference"
    print("KERNEL_OK")
</pallas_src>

<mosaic_0001>
module attributes {stable_mosaic.version = 11 : i64} {
  func.func @_cbam_kernel(%arg0: i32, %arg1: memref<1x32x256xf32, #tpu.memory_space<vmem>>, %arg2: memref<32x2xf32, #tpu.memory_space<vmem>>, %arg3: memref<32x2xf32, #tpu.memory_space<vmem>>, %arg4: memref<49x2x256xf32, #tpu.memory_space<vmem>>, %arg5: memref<1x32x256xf32, #tpu.memory_space<vmem>>, %arg6: memref<2x256xf32, #tpu.memory_space<vmem>>) attributes {dimension_semantics = [#tpu.dimension_semantics<parallel>], iteration_bounds = array<i64: 2>, scalar_prefetch = 0 : i64, scratch_operands = 1 : i64, tpu.core_type = #tpu.core_type<tc>, window_params = [{transform_indices = @transform_0, window_bounds = array<i64: 1, 32, 256>}, {pipeline_mode = #tpu.pipeline_mode<synchronous>, transform_indices = @transform_1, window_bounds = array<i64: 32, 2>}, {pipeline_mode = #tpu.pipeline_mode<synchronous>, transform_indices = @transform_2, window_bounds = array<i64: 32, 2>}, {pipeline_mode = #tpu.pipeline_mode<synchronous>, transform_indices = @transform_3, window_bounds = array<i64: 49, 2, 256>}, {transform_indices = @transform_4, window_bounds = array<i64: 1, 32, 256>}]} {
    %c0 = arith.constant 0 : index
    %c0_0 = arith.constant 0 : index
    %0 = vector.load %arg2[%c0, %c0_0] : memref<32x2xf32, #tpu.memory_space<vmem>>, vector<32x2xf32>
    %c0_1 = arith.constant 0 : index
    %c0_2 = arith.constant 0 : index
    %1 = vector.load %arg3[%c0_1, %c0_2] : memref<32x2xf32, #tpu.memory_space<vmem>>, vector<32x2xf32>
    %c0_i32 = arith.constant 0 : i32
    %2 = arith.index_cast %c0_i32 : i32 to index
    %c0_3 = arith.constant 0 : index
    %c0_4 = arith.constant 0 : index
    %3 = vector.load %arg1[%2, %c0_3, %c0_4] : memref<1x32x256xf32, #tpu.memory_space<vmem>>, vector<1x32x256xf32>
    %4 = vector.shape_cast %3 : vector<1x32x256xf32> to vector<32x256xf32>
    %cst = arith.constant dense<0.000000e+00> : vector<32xf32>
    %5 = vector.multi_reduction <add>, %4, %cst [1] : vector<32x256xf32> to vector<32xf32>
    %6 = vector.shape_cast %5 : vector<32xf32> to vector<32x1xf32>
    %cst_5 = arith.constant 3.906250e-03 : f32
    %7 = vector.broadcast %cst_5 : f32 to vector<32x1xf32>
    %8 = arith.mulf %6, %7 : vector<32x1xf32>
    %cst_6 = arith.constant dense<0xFF800000> : vector<32xf32>
    %9 = vector.multi_reduction <maximumf>, %4, %cst_6 [1] : vector<32x256xf32> to vector<32xf32>
    %10 = vector.shape_cast %9 : vector<32xf32> to vector<32x1xf32>
    %11 = vector.broadcast %8 : vector<32x1xf32> to vector<32x2xf32>
    %12 = arith.mulf %0, %11 : vector<32x2xf32>
    %cst_7 = arith.constant dense<0.000000e+00> : vector<2xf32>
    %13 = vector.multi_reduction <add>, %12, %cst_7 [0] : vector<32x2xf32> to vector<2xf32>
    %14 = vector.shape_cast %13 : vector<2xf32> to vector<1x2xf32>
    %cst_8 = arith.constant 0.000000e+00 : f32
    %15 = vector.broadcast %cst_8 : f32 to vector<1x2xf32>
    %16 = arith.maximumf %14, %15 : vector<1x2xf32>
    %17 = vector.broadcast %16 : vector<1x2xf32> to vector<32x2xf32>
    %18 = arith.mulf %1, %17 : vector<32x2xf32>
    %cst_9 = arith.constant dense<0.000000e+00> : vector<32xf32>
    %19 = vector.multi_reduction <add>, %18, %cst_9 [1] : vector<32x2xf32> to vector<32xf32>
    %20 = vector.shape_cast %19 : vector<32xf32> to vector<32x1xf32>
    %21 = vector.broadcast %10 : vector<32x1xf32> to vector<32x2xf32>
    %22 = arith.mulf %0, %21 : vector<32x2xf32>
    %cst_10 = arith.constant dense<0.000000e+00> : vector<2xf32>
    %23 = vector.multi_reduction <add>, %22, %cst_10 [0] : vector<32x2xf32> to vector<2xf32>
    %24 = vector.shape_cast %23 : vector<2xf32> to vector<1x2xf32>
    %cst_11 = arith.constant 0.000000e+00 : f32
    %25 = vector.broadcast %cst_11 : f32 to vector<1x2xf32>
    %26 = arith.maximumf %24, %25 : vector<1x2xf32>
    %27 = vector.broadcast %26 : vector<1x2xf32> to vector<32x2xf32>
    %28 = arith.mulf %1, %27 : vector<32x2xf32>
    %cst_12 = arith.constant dense<0.000000e+00> : vector<32xf32>
    %29 = vector.multi_reduction <add>, %28, %cst_12 [1] : vector<32x2xf32> to vector<32xf32>
    %30 = vector.shape_cast %29 : vector<32xf32> to vector<32x1xf32>
    %31 = arith.addf %20, %30 : vector<32x1xf32>
    %32 = arith.negf %31 : vector<32x1xf32>
    %33 = math.exp %32 : vector<32x1xf32>
    %cst_13 = arith.constant 1.000000e+00 : f32
    %34 = vector.broadcast %cst_13 : f32 to vector<32x1xf32>
    %35 = arith.addf %34, %33 : vector<32x1xf32>
    %36 = arith.divf %34, %35 : vector<32x1xf32>
    %37 = vector.broadcast %36 : vector<32x1xf32> to vector<32x256xf32>
    %38 = arith.mulf %4, %37 : vector<32x256xf32>
    %39 = arith.index_cast %c0_i32 : i32 to index
    %c0_14 = arith.constant 0 : index
    %c0_15 = arith.constant 0 : index
    %40 = vector.load %arg5[%39, %c0_14, %c0_15] : memref<1x32x256xf32, #tpu.memory_space<vmem>>, vector<1x32x256xf32>
    %41 = vector.shape_cast %40 : vector<1x32x256xf32> to vector<32x256xf32>
    %42 = vector.shape_cast %38 : vector<32x256xf32> to vector<1x32x256xf32>
    tpu.vector_store %arg5[%39, %c0_14, %c0_15], %42 {strides = array<i32>} : memref<1x32x256xf32, #tpu.memory_space<vmem>>, vector<1x32x256xf32>,
    %cst_16 = arith.constant dense<0.000000e+00> : vector<256xf32>
    %43 = vector.multi_reduction <add>, %38, %cst_16 [0] : vector<32x256xf32> to vector<256xf32>
    %44 = vector.shape_cast %43 : vector<256xf32> to vector<1x256xf32>
    %cst_17 = arith.constant 3.125000e-02 : f32
    %45 = vector.broadcast %cst_17 : f32 to vector<1x256xf32>
    %46 = arith.mulf %44, %45 : vector<1x256xf32>
    %47 = arith.index_cast %c0_i32 : i32 to index
    %c0_18 = arith.constant 0 : index
    %48 = vector.load %arg6[%47, %c0_18] : memref<2x256xf32, #tpu.memory_space<vmem>>, vector<1x256xf32>
    tpu.vector_store %arg6[%47, %c0_18], %46 {strides = array<i32>} : memref<2x256xf32, #tpu.memory_space<vmem>>, vector<1x256xf32>,
    %cst_19 = arith.constant dense<0xFF800000> : vector<256xf32>
    %49 = vector.multi_reduction <maximumf>, %38, %cst_19 [0] : vector<32x256xf32> to vector<256xf32>
    %50 = vector.shape_cast %49 : vector<256xf32> to vector<1x256xf32>
    %c1_i32 = arith.constant 1 : i32
    %51 = arith.addi %c1_i32, %c0_i32 : i32
    %52 = arith.index_cast %51 : i32 to index
    %c0_20 = arith.constant 0 : index
    %53 = vector.load %arg6[%52, %c0_20] : memref<2x256xf32, #tpu.memory_space<vmem>>, vector<1x256xf32>
    tpu.vector_store %arg6[%52, %c0_20], %50 {strides = array<i32>} : memref<2x256xf32, #tpu.memory_space<vmem>>, vector<1x256xf32>,
    %c1_i32_21 = arith.constant 1 : i32
    %c0_22 = arith.constant 0 : index
    %c0_23 = arith.constant 0 : index
    %54 = vector.load %arg6[%c0_22, %c0_23] : memref<2x256xf32, #tpu.memory_space<vmem>>, vector<2x256xf32>
    %cst_24 = arith.constant 0.000000e+00 : f32
    %55 = vector.broadcast %cst_24 : f32 to vector<2x256xf32>
    %c51_i32 = arith.constant 51 : i32
    %56 = tpu.dynamic_rotate %54 by %c51_i32 dim 1 : vector<2x256xf32>, i32 -> vector<2x256xf32>
    %c0_25 = arith.constant 0 : index
    %c0_26 = arith.constant 0 : index
    %c0_27 = arith.constant 0 : index
    %57 = vector.load %arg4[%c0_25, %c0_26, %c0_27] : memref<49x2x256xf32, #tpu.memory_space<vmem>>, vector<1x2x256xf32>
    %58 = vector.shape_cast %57 : vector<1x2x256xf32> to vector<2x256xf32>
    %59 = arith.mulf %58, %56 : vector<2x256xf32>
    %60 = arith.addf %55, %59 : vector<2x256xf32>
    %c50_i32 = arith.constant 50 : i32
    %61 = tpu.dynamic_rotate %54 by %c50_i32 dim 1 : vector<2x256xf32>, i32 -> vector<2x256xf32>
    %c1 = arith.constant 1 : index
    %c0_28 = arith.constant 0 : index
    %c0_29 = arith.constant 0 : index
    %62 = vector.load %arg4[%c1, %c0_28, %c0_29] : memref<49x2x256xf32, #tpu.memory_space<vmem>>, vector<1x2x256xf32>
    %63 = vector.shape_cast %62 : vector<1x2x256xf32> to vector<2x256xf32>
    %64 = arith.mulf %63, %61 : vector<2x256xf32>
    %65 = arith.addf %60, %64 : vector<2x256xf32>
    %c49_i32 = arith.constant 49 : i32
    %66 = tpu.dynamic_rotate %54 by %c49_i32 dim 1 : vector<2x256xf32>, i32 -> vector<2x256xf32>
    %c2 = arith.constant 2 : index
    %c0_30 = arith.constant 0 : index
    %c0_31 = arith.constant 0 : index
    %67 = vector.load %arg4[%c2, %c0_30, %c0_31] : memref<49x2x256xf32, #tpu.memory_space<vmem>>, vector<1x2x256xf32>
    %68 = vector.shape_cast %67 : vector<1x2x256xf32> to vector<2x256xf32>
    %69 = arith.mulf %68, %66 : vector<2x256xf32>
    %70 = arith.addf %65, %69 : vector<2x256xf32>
    %c48_i32 = arith.constant 48 : i32
    %71 = tpu.dynamic_rotate %54 by %c48_i32 dim 1 : vector<2x256xf32>, i32 -> vector<2x256xf32>
    %c3 = arith.constant 3 : index
    %c0_32 = arith.constant 0 : index
    %c0_33 = arith.constant 0 : index
    %72 = vector.load %arg4[%c3, %c0_32, %c0_33] : memref<49x2x256xf32, #tpu.memory_space<vmem>>, vector<1x2x256xf32>
    %73 = vector.shape_cast %72 : vector<1x2x256xf32> to vector<2x256xf32>
    %74 = arith.mulf %73, %71 : vector<2x256xf32>
    %75 = arith.addf %70, %74 : vector<2x256xf32>
    %c47_i32 = arith.constant 47 : i32
    %76 = tpu.dynamic_rotate %54 by %c47_i32 dim 1 : vector<2x256xf32>, i32 -> vector<2x256xf32>
    %c4 = arith.constant 4 : index
    %c0_34 = arith.constant 0 : index
    %c0_35 = arith.constant 0 : index
    %77 = vector.load %arg4[%c4, %c0_34, %c0_35] : memref<49x2x256xf32, #tpu.memory_space<vmem>>, vector<1x2x256xf32>
    %78 = vector.shape_cast %77 : vector<1x2x256xf32> to vector<2x256xf32>
    %79 = arith.mulf %78, %76 : vector<2x256xf32>
    %80 = arith.addf %75, %79 : vector<2x256xf32>
    %c46_i32 = arith.constant 46 : i32
    %81 = tpu.dynamic_rotate %54 by %c46_i32 dim 1 : vector<2x256xf32>, i32 -> vector<2x256xf32>
    %c5 = arith.constant 5 : index
    %c0_36 = arith.constant 0 : index
    %c0_37 = arith.constant 0 : index
    %82 = vector.load %arg4[%c5, %c0_36, %c0_37] : memref<49x2x256xf32, #tpu.memory_space<vmem>>, vector<1x2x256xf32>
    %83 = vector.shape_cast %82 : vector<1x2x256xf32> to vector<2x256xf32>
    %84 = arith.mulf %83, %81 : vector<2x256xf32>
    %85 = arith.addf %80, %84 : vector<2x256xf32>
    %c45_i32 = arith.constant 45 : i32
    %86 = tpu.dynamic_rotate %54 by %c45_i32 dim 1 : vector<2x256xf32>, i32 -> vector<2x256xf32>
    %c6 = arith.constant 6 : index
    %c0_38 = arith.constant 0 : index
    %c0_39 = arith.constant 0 : index
    %87 = vector.load %arg4[%c6, %c0_38, %c0_39] : memref<49x2x256xf32, #tpu.memory_space<vmem>>, vector<1x2x256xf32>
    %88 = vector.shape_cast %87 : vector<1x2x256xf32> to vector<2x256xf32>
    %89 = arith.mulf %88, %86 : vector<2x256xf32>
    %90 = arith.addf %85, %89 : vector<2x256xf32>
    %c35_i32 = arith.constant 35 : i32
    %91 = tpu.dynamic_rotate %54 by %c35_i32 dim 1 : vector<2x256xf32>, i32 -> vector<2x256xf32>
    %c7 = arith.constant 7 : index
    %c0_40 = arith.constant 0 : index
    %c0_41 = arith.constant 0 : index
    %92 = vector.load %arg4[%c7, %c0_40, %c0_41] : memref<49x2x256xf32, #tpu.memory_space<vmem>>, vector<1x2x256xf32>
    %93 = vector.shape_cast %92 : vector<1x2x256xf32> to vector<2x256xf32>
    %94 = arith.mulf %93, %91 : vector<2x256xf32>
    %95 = arith.addf %90, %94 : vector<2x256xf32>
    %c34_i32 = arith.constant 34 : i32
    %96 = tpu.dynamic_rotate %54 by %c34_i32 dim 1 : vector<2x256xf32>, i32 -> vector<2x256xf32>
    %c8 = arith.constant 8 : index
    %c0_42 = arith.constant 0 : index
    %c0_43 = arith.constant 0 : index
    %97 = vector.load %arg4[%c8, %c0_42, %c0_43] : memref<49x2x256xf32, #tpu.memory_space<vmem>>, vector<1x2x256xf32>
    %98 = vector.shape_cast %97 : vector<1x2x256xf32> to vector<2x256xf32>
    %99 = arith.mulf %98, %96 : vector<2x256xf32>
    %100 = arith.addf %95, %99 : vector<2x256xf32>
    %c33_i32 = arith.constant 33 : i32
    %101 = tpu.dynamic_rotate %54 by %c33_i32 dim 1 : vector<2x256xf32>, i32 -> vector<2x256xf32>
    %c9 = arith.constant 9 : index
    %c0_44 = arith.constant 0 : index
    %c0_45 = arith.constant 0 : index
    %102 = vector.load %arg4[%c9, %c0_44, %c0_45] : memref<49x2x256xf32, #tpu.memory_space<vmem>>, vector<1x2x256xf32>
    %103 = vector.shape_cast %102 : vector<1x2x256xf32> to vector<2x256xf32>
    %104 = arith.mulf %103, %101 : vector<2x256xf32>
    %105 = arith.addf %100, %104 : vector<2x256xf32>
    %c32_i32 = arith.constant 32 : i32
    %106 = tpu.dynamic_rotate %54 by %c32_i32 dim 1 : vector<2x256xf32>, i32 -> vector<2x256xf32>
    %c10 = arith.constant 10 : index
    %c0_46 = arith.constant 0 : index
    %c0_47 = arith.constant 0 : index
    %107 = vector.load %arg4[%c10, %c0_46, %c0_47] : memref<49x2x256xf32, #tpu.memory_space<vmem>>, vector<1x2x256xf32>
    %108 = vector.shape_cast %107 : vector<1x2x256xf32> to vector<2x256xf32>
    %109 = arith.mulf %108, %106 : vector<2x256xf32>
    %110 = arith.addf %105, %109 : vector<2x256xf32>
    %c31_i32 = arith.constant 31 : i32
    %111 = tpu.dynamic_rotate %54 by %c31_i32 dim 1 : vector<2x256xf32>, i32 -> vector<2x256xf32>
    %c11 = arith.constant 11 : index
    %c0_48 = arith.constant 0 : index
    %c0_49 = arith.constant 0 : index
    %112 = vector.load %arg4[%c11, %c0_48, %c0_49] : memref<49x2x256xf32, #tpu.memory_space<vmem>>, vector<1x2x256xf32>
    %113 = vector.shape_cast %112 : vector<1x2x256xf32> to vector<2x256xf32>
    %114 = arith.mulf %113, %111 : vector<2x256xf32>
    %115 = arith.addf %110, %114 : vector<2x256xf32>
    %c30_i32 = arith.constant 30 : i32
    %116 = tpu.dynamic_rotate %54 by %c30_i32 dim 1 : vector<2x256xf32>, i32 -> vector<2x256xf32>
    %c12 = arith.constant 12 : index
    %c0_50 = arith.constant 0 : index
    %c0_51 = arith.constant 0 : index
    %117 = vector.load %arg4[%c12, %c0_50, %c0_51] : memref<49x2x256xf32, #tpu.memory_space<vmem>>, vector<1x2x256xf32>
    %118 = vector.shape_cast %117 : vector<1x2x256xf32> to vector<2x256xf32>
    %119 = arith.mulf %118, %116 : vector<2x256xf32>
    %120 = arith.addf %115, %119 : vector<2x256xf32>
    %c29_i32 = arith.constant 29 : i32
    %121 = tpu.dynamic_rotate %54 by %c29_i32 dim 1 : vector<2x256xf32>, i32 -> vector<2x256xf32>
    %c13 = arith.constant 13 : index
    %c0_52 = arith.constant 0 : index
    %c0_53 = arith.constant 0 : index
    %122 = vector.load %arg4[%c13, %c0_52, %c0_53] : memref<49x2x256xf32, #tpu.memory_space<vmem>>, vector<1x2x256xf32>
    %123 = vector.shape_cast %122 : vector<1x2x256xf32> to vector<2x256xf32>
    %124 = arith.mulf %123, %121 : vector<2x256xf32>
    %125 = arith.addf %120, %124 : vector<2x256xf32>
    %c19_i32 = arith.constant 19 : i32
    %126 = tpu.dynamic_rotate %54 by %c19_i32 dim 1 : vector<2x256xf32>, i32 -> vector<2x256xf32>
    %c14 = arith.constant 14 : index
    %c0_54 = arith.constant 0 : index
    %c0_55 = arith.constant 0 : index
    %127 = vector.load %arg4[%c14, %c0_54, %c0_55] : memref<49x2x256xf32, #tpu.memory_space<vmem>>, vector<1x2x256xf32>
    %128 = vector.shape_cast %127 : vector<1x2x256xf32> to vector<2x256xf32>
    %129 = arith.mulf %128, %126 : vector<2x256xf32>
    %130 = arith.addf %125, %129 : vector<2x256xf32>
    %c18_i32 = arith.constant 18 : i32
    %131 = tpu.dynamic_rotate %54 by %c18_i32 dim 1 : vector<2x256xf32>, i32 -> vector<2x256xf32>
    %c15 = arith.constant 15 : index
    %c0_56 = arith.constant 0 : index
    %c0_57 = arith.constant 0 : index
    %132 = vector.load %arg4[%c15, %c0_56, %c0_57] : memref<49x2x256xf32, #tpu.memory_space<vmem>>, vector<1x2x256xf32>
    %133 = vector.shape_cast %132 : vector<1x2x256xf32> to vector<2x256xf32>
    %134 = arith.mulf %133, %131 : vector<2x256xf32>
    %135 = arith.addf %130, %134 : vector<2x256xf32>
    %c17_i32 = arith.constant 17 : i32
    %136 = tpu.dynamic_rotate %54 by %c17_i32 dim 1 : vector<2x256xf32>, i32 -> vector<2x256xf32>
    %c16 = arith.constant 16 : index
    %c0_58 = arith.constant 0 : index
    %c0_59 = arith.constant 0 : index
    %137 = vector.load %arg4[%c16, %c0_58, %c0_59] : memref<49x2x256xf32, #tpu.memory_space<vmem>>, vector<1x2x256xf32>
    %138 = vector.shape_cast %137 : vector<1x2x256xf32> to vector<2x256xf32>
    %139 = arith.mulf %138, %136 : vector<2x256xf32>
    %140 = arith.addf %135, %139 : vector<2x256xf32>
    %c16_i32 = arith.constant 16 : i32
    %141 = tpu.dynamic_rotate %54 by %c16_i32 dim 1 : vector<2x256xf32>, i32 -> vector<2x256xf32>
    %c17 = arith.constant 17 : index
    %c0_60 = arith.constant 0 : index
    %c0_61 = arith.constant 0 : index
    %142 = vector.load %arg4[%c17, %c0_60, %c0_61] : memref<49x2x256xf32, #tpu.memory_space<vmem>>, vector<1x2x256xf32>
    %143 = vector.shape_cast %142 : vector<1x2x256xf32> to vector<2x256xf32>
    %144 = arith.mulf %143, %141 : vector<2x256xf32>
    %145 = arith.addf %140, %144 : vector<2x256xf32>
    %c15_i32 = arith.constant 15 : i32
    %146 = tpu.dynamic_rotate %54 by %c15_i32 dim 1 : vector<2x256xf32>, i32 -> vector<2x256xf32>
    %c18 = arith.constant 18 : index
    %c0_62 = arith.constant 0 : index
    %c0_63 = arith.constant 0 : index
    %147 = vector.load %arg4[%c18, %c0_62, %c0_63] : memref<49x2x256xf32, #tpu.memory_space<vmem>>, vector<1x2x256xf32>
    %148 = vector.shape_cast %147 : vector<1x2x256xf32> to vector<2x256xf32>
    %149 = arith.mulf %148, %146 : vector<2x256xf32>
    %150 = arith.addf %145, %149 : vector<2x256xf32>
    %c14_i32 = arith.constant 14 : i32
    %151 = tpu.dynamic_rotate %54 by %c14_i32 dim 1 : vector<2x256xf32>, i32 -> vector<2x256xf32>
    %c19 = arith.constant 19 : index
    %c0_64 = arith.constant 0 : index
    %c0_65 = arith.constant 0 : index
    %152 = vector.load %arg4[%c19, %c0_64, %c0_65] : memref<49x2x256xf32, #tpu.memory_space<vmem>>, vector<1x2x256xf32>
    %153 = vector.shape_cast %152 : vector<1x2x256xf32> to vector<2x256xf32>
    %154 = arith.mulf %153, %151 : vector<2x256xf32>
    %155 = arith.addf %150, %154 : vector<2x256xf32>
    %c13_i32 = arith.constant 13 : i32
    %156 = tpu.dynamic_rotate %54 by %c13_i32 dim 1 : vector<2x256xf32>, i32 -> vector<2x256xf32>
    %c20 = arith.constant 20 : index
    %c0_66 = arith.constant 0 : index
    %c0_67 = arith.constant 0 : index
    %157 = vector.load %arg4[%c20, %c0_66, %c0_67] : memref<49x2x256xf32, #tpu.memory_space<vmem>>, vector<1x2x256xf32>
    %158 = vector.shape_cast %157 : vector<1x2x256xf32> to vector<2x256xf32>
    %159 = arith.mulf %158, %156 : vector<2x256xf32>
    %160 = arith.addf %155, %159 : vector<2x256xf32>
    %c3_i32 = arith.constant 3 : i32
    %161 = tpu.dynamic_rotate %54 by %c3_i32 dim 1 : vector<2x256xf32>, i32 -> vector<2x256xf32>
    %c21 = arith.constant 21 : index
    %c0_68 = arith.constant 0 : index
    %c0_69 = arith.constant 0 : index
    %162 = vector.load %arg4[%c21, %c0_68, %c0_69] : memref<49x2x256xf32, #tpu.memory_space<vmem>>, vector<1x2x256xf32>
    %163 = vector.shape_cast %162 : vector<1x2x256xf32> to vector<2x256xf32>
    %164 = arith.mulf %163, %161 : vector<2x256xf32>
    %165 = arith.addf %160, %164 : vector<2x256xf32>
    %c2_i32 = arith.constant 2 : i32
    %166 = tpu.dynamic_rotate %54 by %c2_i32 dim 1 : vector<2x256xf32>, i32 -> vector<2x256xf32>
    %c22 = arith.constant 22 : index
    %c0_70 = arith.constant 0 : index
    %c0_71 = arith.constant 0 : index
    %167 = vector.load %arg4[%c22, %c0_70, %c0_71] : memref<49x2x256xf32, #tpu.memory_space<vmem>>, vector<1x2x256xf32>
    %168 = vector.shape_cast %167 : vector<1x2x256xf32> to vector<2x256xf32>
    %169 = arith.mulf %168, %166 : vector<2x256xf32>
    %170 = arith.addf %165, %169 : vector<2x256xf32>
    %c1_i32_72 = arith.constant 1 : i32
    %171 = tpu.dynamic_rotate %54 by %c1_i32_72 dim 1 : vector<2x256xf32>, i32 -> vector<2x256xf32>
    %c23 = arith.constant 23 : index
    %c0_73 = arith.constant 0 : index
    %c0_74 = arith.constant 0 : index
    %172 = vector.load %arg4[%c23, %c0_73, %c0_74] : memref<49x2x256xf32, #tpu.memory_space<vmem>>, vector<1x2x256xf32>
    %173 = vector.shape_cast %172 : vector<1x2x256xf32> to vector<2x256xf32>
    %174 = arith.mulf %173, %171 : vector<2x256xf32>
    %175 = arith.addf %170, %174 : vector<2x256xf32>
    %c24 = arith.constant 24 : index
    %c0_75 = arith.constant 0 : index
    %c0_76 = arith.constant 0 : index
    %176 = vector.load %arg4[%c24, %c0_75, %c0_76] : memref<49x2x256xf32, #tpu.memory_space<vmem>>, vector<1x2x256xf32>
    %177 = vector.shape_cast %176 : vector<1x2x256xf32> to vector<2x256xf32>
    %178 = arith.mulf %177, %54 : vector<2x256xf32>
    %179 = arith.addf %175, %178 : vector<2x256xf32>
    %c255_i32 = arith.constant 255 : i32
    %180 = tpu.dynamic_rotate %54 by %c255_i32 dim 1 : vector<2x256xf32>, i32 -> vector<2x256xf32>
    %c25 = arith.constant 25 : index
    %c0_77 = arith.constant 0 : index
    %c0_78 = arith.constant 0 : index
    %181 = vector.load %arg4[%c25, %c0_77, %c0_78] : memref<49x2x256xf32, #tpu.memory_space<vmem>>, vector<1x2x256xf32>
    %182 = vector.shape_cast %181 : vector<1x2x256xf32> to vector<2x256xf32>
    %183 = arith.mulf %182, %180 : vector<2x256xf32>
    %184 = arith.addf %179, %183 : vector<2x256xf32>
    %c254_i32 = arith.constant 254 : i32
    %185 = tpu.dynamic_rotate %54 by %c254_i32 dim 1 : vector<2x256xf32>, i32 -> vector<2x256xf32>
    %c26 = arith.constant 26 : index
    %c0_79 = arith.constant 0 : index
    %c0_80 = arith.constant 0 : index
    %186 = vector.load %arg4[%c26, %c0_79, %c0_80] : memref<49x2x256xf32, #tpu.memory_space<vmem>>, vector<1x2x256xf32>
    %187 = vector.shape_cast %186 : vector<1x2x256xf32> to vector<2x256xf32>
    %188 = arith.mulf %187, %185 : vector<2x256xf32>
    %189 = arith.addf %184, %188 : vector<2x256xf32>
    %c253_i32 = arith.constant 253 : i32
    %190 = tpu.dynamic_rotate %54 by %c253_i32 dim 1 : vector<2x256xf32>, i32 -> vector<2x256xf32>
    %c27 = arith.constant 27 : index
    %c0_81 = arith.constant 0 : index
    %c0_82 = arith.constant 0 : index
    %191 = vector.load %arg4[%c27, %c0_81, %c0_82] : memref<49x2x256xf32, #tpu.memory_space<vmem>>, vector<1x2x256xf32>
    %192 = vector.shape_cast %191 : vector<1x2x256xf32> to vector<2x256xf32>
    %193 = arith.mulf %192, %190 : vector<2x256xf32>
    %194 = arith.addf %189, %193 : vector<2x256xf32>
    %c243_i32 = arith.constant 243 : i32
    %195 = tpu.dynamic_rotate %54 by %c243_i32 dim 1 : vector<2x256xf32>, i32 -> vector<2x256xf32>
    %c28 = arith.constant 28 : index
    %c0_83 = arith.constant 0 : index
    %c0_84 = arith.constant 0 : index
    %196 = vector.load %arg4[%c28, %c0_83, %c0_84] : memref<49x2x256xf32, #tpu.memory_space<vmem>>, vector<1x2x256xf32>
    %197 = vector.shape_cast %196 : vector<1x2x256xf32> to vector<2x256xf32>
    %198 = arith.mulf %197, %195 : vector<2x256xf32>
    %199 = arith.addf %194, %198 : vector<2x256xf32>
    %c242_i32 = arith.constant 242 : i32
    %200 = tpu.dynamic_rotate %54 by %c242_i32 dim 1 : vector<2x256xf32>, i32 -> vector<2x256xf32>
    %c29 = arith.constant 29 : index
    %c0_85 = arith.constant 0 : index
    %c0_86 = arith.constant 0 : index
    %201 = vector.load %arg4[%c29, %c0_85, %c0_86] : memref<49x2x256xf32, #tpu.memory_space<vmem>>, vector<1x2x256xf32>
    %202 = vector.shape_cast %201 : vector<1x2x256xf32> to vector<2x256xf32>
    %203 = arith.mulf %202, %200 : vector<2x256xf32>
    %204 = arith.addf %199, %203 : vector<2x256xf32>
    %c241_i32 = arith.constant 241 : i32
    %205 = tpu.dynamic_rotate %54 by %c241_i32 dim 1 : vector<2x256xf32>, i32 -> vector<2x256xf32>
    %c30 = arith.constant 30 : index
    %c0_87 = arith.constant 0 : index
    %c0_88 = arith.constant 0 : index
    %206 = vector.load %arg4[%c30, %c0_87, %c0_88] : memref<49x2x256xf32, #tpu.memory_space<vmem>>, vector<1x2x256xf32>
    %207 = vector.shape_cast %206 : vector<1x2x256xf32> to vector<2x256xf32>
    %208 = arith.mulf %207, %205 : vector<2x256xf32>
    %209 = arith.addf %204, %208 : vector<2x256xf32>
    %c240_i32 = arith.constant 240 : i32
    %210 = tpu.dynamic_rotate %54 by %c240_i32 dim 1 : vector<2x256xf32>, i32 -> vector<2x256xf32>
    %c31 = arith.constant 31 : index
    %c0_89 = arith.constant 0 : index
    %c0_90 = arith.constant 0 : index
    %211 = vector.load %arg4[%c31, %c0_89, %c0_90] : memref<49x2x256xf32, #tpu.memory_space<vmem>>, vector<1x2x256xf32>
    %212 = vector.shape_cast %211 : vector<1x2x256xf32> to vector<2x256xf32>
    %213 = arith.mulf %212, %210 : vector<2x256xf32>
    %214 = arith.addf %209, %213 : vector<2x256xf32>
    %c239_i32 = arith.constant 239 : i32
    %215 = tpu.dynamic_rotate %54 by %c239_i32 dim 1 : vector<2x256xf32>, i32 -> vector<2x256xf32>
    %c32 = arith.constant 32 : index
    %c0_91 = arith.constant 0 : index
    %c0_92 = arith.constant 0 : index
    %216 = vector.load %arg4[%c32, %c0_91, %c0_92] : memref<49x2x256xf32, #tpu.memory_space<vmem>>, vector<1x2x256xf32>
    %217 = vector.shape_cast %216 : vector<1x2x256xf32> to vector<2x256xf32>
    %218 = arith.mulf %217, %215 : vector<2x256xf32>
    %219 = arith.addf %214, %218 : vector<2x256xf32>
    %c238_i32 = arith.constant 238 : i32
    %220 = tpu.dynamic_rotate %54 by %c238_i32 dim 1 : vector<2x256xf32>, i32 -> vector<2x256xf32>
    %c33 = arith.constant 33 : index
    %c0_93 = arith.constant 0 : index
    %c0_94 = arith.constant 0 : index
    %221 = vector.load %arg4[%c33, %c0_93, %c0_94] : memref<49x2x256xf32, #tpu.memory_space<vmem>>, vector<1x2x256xf32>
    %222 = vector.shape_cast %221 : vector<1x2x256xf32> to vector<2x256xf32>
    %223 = arith.mulf %222, %220 : vector<2x256xf32>
    %224 = arith.addf %219, %223 : vector<2x256xf32>
    %c237_i32 = arith.constant 237 : i32
    %225 = tpu.dynamic_rotate %54 by %c237_i32 dim 1 : vector<2x256xf32>, i32 -> vector<2x256xf32>
    %c34 = arith.constant 34 : index
    %c0_95 = arith.constant 0 : index
    %c0_96 = arith.constant 0 : index
    %226 = vector.load %arg4[%c34, %c0_95, %c0_96] : memref<49x2x256xf32, #tpu.memory_space<vmem>>, vector<1x2x256xf32>
    %227 = vector.shape_cast %226 : vector<1x2x256xf32> to vector<2x256xf32>
    %228 = arith.mulf %227, %225 : vector<2x256xf32>
    %229 = arith.addf %224, %228 : vector<2x256xf32>
    %c227_i32 = arith.constant 227 : i32
    %230 = tpu.dynamic_rotate %54 by %c227_i32 dim 1 : vector<2x256xf32>, i32 -> vector<2x256xf32>
    %c35 = arith.constant 35 : index
    %c0_97 = arith.constant 0 : index
    %c0_98 = arith.constant 0 : index
    %231 = vector.load %arg4[%c35, %c0_97, %c0_98] : memref<49x2x256xf32, #tpu.memory_space<vmem>>, vector<1x2x256xf32>
    %232 = vector.shape_cast %231 : vector<1x2x256xf32> to vector<2x256xf32>
    %233 = arith.mulf %232, %230 : vector<2x256xf32>
    %234 = arith.addf %229, %233 : vector<2x256xf32>
    %c226_i32 = arith.constant 226 : i32
    %235 = tpu.dynamic_rotate %54 by %c226_i32 dim 1 : vector<2x256xf32>, i32 -> vector<2x256xf32>
    %c36 = arith.constant 36 : index
    %c0_99 = arith.constant 0 : index
    %c0_100 = arith.constant 0 : index
    %236 = vector.load %arg4[%c36, %c0_99, %c0_100] : memref<49x2x256xf32, #tpu.memory_space<vmem>>, vector<1x2x256xf32>
    %237 = vector.shape_cast %236 : vector<1x2x256xf32> to vector<2x256xf32>
    %238 = arith.mulf %237, %235 : vector<2x256xf32>
    %239 = arith.addf %234, %238 : vector<2x256xf32>
    %c225_i32 = arith.constant 225 : i32
    %240 = tpu.dynamic_rotate %54 by %c225_i32 dim 1 : vector<2x256xf32>, i32 -> vector<2x256xf32>
    %c37 = arith.constant 37 : index
    %c0_101 = arith.constant 0 : index
    %c0_102 = arith.constant 0 : index
    %241 = vector.load %arg4[%c37, %c0_101, %c0_102] : memref<49x2x256xf32, #tpu.memory_space<vmem>>, vector<1x2x256xf32>
    %242 = vector.shape_cast %241 : vector<1x2x256xf32> to vector<2x256xf32>
    %243 = arith.mulf %242, %240 : vector<2x256xf32>
    %244 = arith.addf %239, %243 : vector<2x256xf32>
    %c224_i32 = arith.constant 224 : i32
    %245 = tpu.dynamic_rotate %54 by %c224_i32 dim 1 : vector<2x256xf32>, i32 -> vector<2x256xf32>
    %c38 = arith.constant 38 : index
    %c0_103 = arith.constant 0 : index
    %c0_104 = arith.constant 0 : index
    %246 = vector.load %arg4[%c38, %c0_103, %c0_104] : memref<49x2x256xf32, #tpu.memory_space<vmem>>, vector<1x2x256xf32>
    %247 = vector.shape_cast %246 : vector<1x2x256xf32> to vector<2x256xf32>
    %248 = arith.mulf %247, %245 : vector<2x256xf32>
    %249 = arith.addf %244, %248 : vector<2x256xf32>
    %c223_i32 = arith.constant 223 : i32
    %250 = tpu.dynamic_rotate %54 by %c223_i32 dim 1 : vector<2x256xf32>, i32 -> vector<2x256xf32>
    %c39 = arith.constant 39 : index
    %c0_105 = arith.constant 0 : index
    %c0_106 = arith.constant 0 : index
    %251 = vector.load %arg4[%c39, %c0_105, %c0_106] : memref<49x2x256xf32, #tpu.memory_space<vmem>>, vector<1x2x256xf32>
    %252 = vector.shape_cast %251 : vector<1x2x256xf32> to vector<2x256xf32>
    %253 = arith.mulf %252, %250 : vector<2x256xf32>
    %254 = arith.addf %249, %253 : vector<2x256xf32>
    %c222_i32 = arith.constant 222 : i32
    %255 = tpu.dynamic_rotate %54 by %c222_i32 dim 1 : vector<2x256xf32>, i32 -> vector<2x256xf32>
    %c40 = arith.constant 40 : index
    %c0_107 = arith.constant 0 : index
    %c0_108 = arith.constant 0 : index
    %256 = vector.load %arg4[%c40, %c0_107, %c0_108] : memref<49x2x256xf32, #tpu.memory_space<vmem>>, vector<1x2x256xf32>
    %257 = vector.shape_cast %256 : vector<1x2x256xf32> to vector<2x256xf32>
    %258 = arith.mulf %257, %255 : vector<2x256xf32>
    %259 = arith.addf %254, %258 : vector<2x256xf32>
    %c221_i32 = arith.constant 221 : i32
    %260 = tpu.dynamic_rotate %54 by %c221_i32 dim 1 : vector<2x256xf32>, i32 -> vector<2x256xf32>
    %c41 = arith.constant 41 : index
    %c0_109 = arith.constant 0 : index
    %c0_110 = arith.constant 0 : index
    %261 = vector.load %arg4[%c41, %c0_109, %c0_110] : memref<49x2x256xf32, #tpu.memory_space<vmem>>, vector<1x2x256xf32>
    %262 = vector.shape_cast %261 : vector<1x2x256xf32> to vector<2x256xf32>
    %263 = arith.mulf %262, %260 : vector<2x256xf32>
    %264 = arith.addf %259, %263 : vector<2x256xf32>
    %c211_i32 = arith.constant 211 : i32
    %265 = tpu.dynamic_rotate %54 by %c211_i32 dim 1 : vector<2x256xf32>, i32 -> vector<2x256xf32>
    %c42 = arith.constant 42 : index
    %c0_111 = arith.constant 0 : index
    %c0_112 = arith.constant 0 : index
    %266 = vector.load %arg4[%c42, %c0_111, %c0_112] : memref<49x2x256xf32, #tpu.memory_space<vmem>>, vector<1x2x256xf32>
    %267 = vector.shape_cast %266 : vector<1x2x256xf32> to vector<2x256xf32>
    %268 = arith.mulf %267, %265 : vector<2x256xf32>
    %269 = arith.addf %264, %268 : vector<2x256xf32>
    %c210_i32 = arith.constant 210 : i32
    %270 = tpu.dynamic_rotate %54 by %c210_i32 dim 1 : vector<2x256xf32>, i32 -> vector<2x256xf32>
    %c43 = arith.constant 43 : index
    %c0_113 = arith.constant 0 : index
    %c0_114 = arith.constant 0 : index
    %271 = vector.load %arg4[%c43, %c0_113, %c0_114] : memref<49x2x256xf32, #tpu.memory_space<vmem>>, vector<1x2x256xf32>
    %272 = vector.shape_cast %271 : vector<1x2x256xf32> to vector<2x256xf32>
    %273 = arith.mulf %272, %270 : vector<2x256xf32>
    %274 = arith.addf %269, %273 : vector<2x256xf32>
    %c209_i32 = arith.constant 209 : i32
    %275 = tpu.dynamic_rotate %54 by %c209_i32 dim 1 : vector<2x256xf32>, i32 -> vector<2x256xf32>
    %c44 = arith.constant 44 : index
    %c0_115 = arith.constant 0 : index
    %c0_116 = arith.constant 0 : index
    %276 = vector.load %arg4[%c44, %c0_115, %c0_116] : memref<49x2x256xf32, #tpu.memory_space<vmem>>, vector<1x2x256xf32>
    %277 = vector.shape_cast %276 : vector<1x2x256xf32> to vector<2x256xf32>
    %278 = arith.mulf %277, %275 : vector<2x256xf32>
    %279 = arith.addf %274, %278 : vector<2x256xf32>
    %c208_i32 = arith.constant 208 : i32
    %280 = tpu.dynamic_rotate %54 by %c208_i32 dim 1 : vector<2x256xf32>, i32 -> vector<2x256xf32>
    %c45 = arith.constant 45 : index
    %c0_117 = arith.constant 0 : index
    %c0_118 = arith.constant 0 : index
    %281 = vector.load %arg4[%c45, %c0_117, %c0_118] : memref<49x2x256xf32, #tpu.memory_space<vmem>>, vector<1x2x256xf32>
    %282 = vector.shape_cast %281 : vector<1x2x256xf32> to vector<2x256xf32>
    %283 = arith.mulf %282, %280 : vector<2x256xf32>
    %284 = arith.addf %279, %283 : vector<2x256xf32>
    %c207_i32 = arith.constant 207 : i32
    %285 = tpu.dynamic_rotate %54 by %c207_i32 dim 1 : vector<2x256xf32>, i32 -> vector<2x256xf32>
    %c46 = arith.constant 46 : index
    %c0_119 = arith.constant 0 : index
    %c0_120 = arith.constant 0 : index
    %286 = vector.load %arg4[%c46, %c0_119, %c0_120] : memref<49x2x256xf32, #tpu.memory_space<vmem>>, vector<1x2x256xf32>
    %287 = vector.shape_cast %286 : vector<1x2x256xf32> to vector<2x256xf32>
    %288 = arith.mulf %287, %285 : vector<2x256xf32>
    %289 = arith.addf %284, %288 : vector<2x256xf32>
    %c206_i32 = arith.constant 206 : i32
    %290 = tpu.dynamic_rotate %54 by %c206_i32 dim 1 : vector<2x256xf32>, i32 -> vector<2x256xf32>
    %c47 = arith.constant 47 : index
    %c0_121 = arith.constant 0 : index
    %c0_122 = arith.constant 0 : index
    %291 = vector.load %arg4[%c47, %c0_121, %c0_122] : memref<49x2x256xf32, #tpu.memory_space<vmem>>, vector<1x2x256xf32>
    %292 = vector.shape_cast %291 : vector<1x2x256xf32> to vector<2x256xf32>
    %293 = arith.mulf %292, %290 : vector<2x256xf32>
    %294 = arith.addf %289, %293 : vector<2x256xf32>
    %c205_i32 = arith.constant 205 : i32
    %295 = tpu.dynamic_rotate %54 by %c205_i32 dim 1 : vector<2x256xf32>, i32 -> vector<2x256xf32>
    %c48 = arith.constant 48 : index
    %c0_123 = arith.constant 0 : index
    %c0_124 = arith.constant 0 : index
    %296 = vector.load %arg4[%c48, %c0_123, %c0_124] : memref<49x2x256xf32, #tpu.memory_space<vmem>>, vector<1x2x256xf32>
    %297 = vector.shape_cast %296 : vector<1x2x256xf32> to vector<2x256xf32>
    %298 = arith.mulf %297, %295 : vector<2x256xf32>
    %299 = arith.addf %294, %298 : vector<2x256xf32>
    %300 = vector.extract_strided_slice %299 {offsets = [0, 0], sizes = [1, 256], strides = [1, 1]} : vector<2x256xf32> to vector<1x256xf32>
    %301 = vector.extract_strided_slice %299 {offsets = [1, 0], sizes = [1, 256], strides = [1, 1]} : vector<2x256xf32> to vector<1x256xf32>
    %302 = arith.addf %300, %301 : vector<1x256xf32>
    %303 = arith.negf %302 : vector<1x256xf32>
    %304 = math.exp %303 : vector<1x256xf32>
    %cst_125 = arith.constant 1.000000e+00 : f32
    %305 = vector.broadcast %cst_125 : f32 to vector<1x256xf32>
    %306 = arith.addf %305, %304 : vector<1x256xf32>
    %307 = arith.divf %305, %306 : vector<1x256xf32>
    %c0_126 = arith.constant 0 : index
    %c0_127 = arith.constant 0 : index
    %308 = vector.load %arg6[%c0_126, %c0_127] : memref<2x256xf32, #tpu.memory_space<vmem>>, vector<1x256xf32>
    tpu.vector_store %arg6[%c0_126, %c0_127], %307 {strides = array<i32>} : memref<2x256xf32, #tpu.memory_space<vmem>>, vector<1x256xf32>,
    %c0_i32_128 = arith.constant 0 : i32
    %309 = arith.index_cast %c0_i32_128 : i32 to index
    %c0_129 = arith.constant 0 : index
    %310 = vector.load %arg6[%309, %c0_129] : memref<2x256xf32, #tpu.memory_space<vmem>>, vector<1x256xf32>
    %311 = arith.index_cast %c0_i32_128 : i32 to index
    %c0_130 = arith.constant 0 : index
    %c0_131 = arith.constant 0 : index
    %312 = vector.load %arg5[%311, %c0_130, %c0_131] : memref<1x32x256xf32, #tpu.memory_space<vmem>>, vector<1x32x256xf32>
    %313 = vector.shape_cast %312 : vector<1x32x256xf32> to vector<32x256xf32>
    %314 = vector.broadcast %310 : vector<1x256xf32> to vector<32x256xf32>
    %315 = arith.mulf %313, %314 : vector<32x256xf32>
    %316 = arith.index_cast %c0_i32_128 : i32 to index
    %c0_132 = arith.constant 0 : index
    %c0_133 = arith.constant 0 : index
    %317 = vector.load %arg5[%316, %c0_132, %c0_133] : memref<1x32x256xf32, #tpu.memory_space<vmem>>, vector<1x32x256xf32>
    %318 = vector.shape_cast %317 : vector<1x32x256xf32> to vector<32x256xf32>
    %319 = vector.shape_cast %315 : vector<32x256xf32> to vector<1x32x256xf32>
    tpu.vector_store %arg5[%316, %c0_132, %c0_133], %319 {strides = array<i32>} : memref<1x32x256xf32, #tpu.memory_space<vmem>>, vector<1x32x256xf32>,
    %c1_i32_134 = arith.constant 1 : i32
    return
  }
  func.func @transform_0(%arg0: i32) -> (i32, i32, i32) {
    %c0_i32 = arith.constant 0 : i32
    %c0_i32_0 = arith.constant 0 : i32
    %c0_i32_1 = arith.constant 0 : i32
    return %arg0, %c0_i32, %c0_i32_0 : i32, i32, i32
  }
  func.func @transform_1(%arg0: i32) -> (i32, i32) {
    %c0_i32 = arith.constant 0 : i32
    %c0_i32_0 = arith.constant 0 : i32
    %c0_i32_1 = arith.constant 0 : i32
    return %c0_i32, %c0_i32_0 : i32, i32
  }
  func.func @transform_2(%arg0: i32) -> (i32, i32) {
    %c0_i32 = arith.constant 0 : i32
    %c0_i32_0 = arith.constant 0 : i32
    %c0_i32_1 = arith.constant 0 : i32
    return %c0_i32, %c0_i32_0 : i32, i32
  }
  func.func @transform_3(%arg0: i32) -> (i32, i32, i32) {
    %c0_i32 = arith.constant 0 : i32
    %c0_i32_0 = arith.constant 0 : i32
    %c0_i32_1 = arith.constant 0 : i32
    %c0_i32_2 = arith.constant 0 : i32
    return %c0_i32, %c0_i32_0, %c0_i32_1 : i32, i32, i32
  }
  func.func @transform_4(%arg0: i32) -> (i32, i32, i32) {
    %c0_i32 = arith.constant 0 : i32
    %c0_i32_0 = arith.constant 0 : i32
    %c0_i32_1 = arith.constant 0 : i32
    return %arg0, %c0_i32, %c0_i32_0 : i32, i32, i32
  }
}

</mosaic_0001>

<llo_original>
// kernel: tpu_custom_call.1
$region0: #{tpu_custom_call.1}
  #allocation0 [shape = 'u32[]', space=smem, size = 0x4, offset = 0x4, fixed_abs, tag = 'smem constant byte address 0x4 - core index']
  #allocation1 [shape = 'u32[144,128]{1,0:T(1,128)}', space=vmem, size = 0x12000, scoped, tag = 'internal scratch']
  #allocation2 [shape = 'f32[2,256]{1,0:T(2,128)}', space=vmem, size = 0x800, scoped, tag = 'scratch operand']
  %s0 = inlined_call_operand.hbm [shape: f32[2,32,256], index: 0, kind: input, shape index: {}]
  %s1 = inlined_call_operand.vmem [shape: f32[32,2], index: 1, kind: input, shape index: {}]
  %s2 = inlined_call_operand.vmem [shape: f32[32,2], index: 2, kind: input, shape index: {}]
  %s3 = inlined_call_operand.hbm [shape: f32[49,2,256], index: 3, kind: input, shape index: {}]
  %s4 = inlined_call_operand.hbm [shape: f32[2,32,256], index: 4, kind: output, shape index: {}]
  %s5 = sld [smem:[#allocation0]]
  $region57: #{tpu_custom_call.1} parent=0
    _
  %s7 = ssub.s32 1, %s5
  %s8 = scalar_select 0, %s7, %s5
  $region1: #{tpu_custom_call.1} parent=0
    #allocation3 [shape = 'u8[65536]{0}', space=vmem, size = 0x10000, scoped, tag = 'input window, operand 0']
    #allocation4 [shape = 's32[2]{0}', space=sflag, size = 0x8, scoped, tag = 'scoped memory for tpu_custom_call.1']
    #allocation5 [shape = 's32[2]{0}', space=sflag, size = 0x8, scoped, tag = 'scoped memory for tpu_custom_call.1']
    #allocation6 [shape = 'u8[100352]{0}', space=vmem, size = 0x18800, scoped, tag = 'input window, operand 3, single buffered']
    #allocation7 [shape = 's32[1]{0}', space=sflag, size = 0x4, scoped, tag = 'scoped memory for tpu_custom_call.1']
    #allocation8 [shape = 'u8[65536]{0}', space=vmem, size = 0x10000, scoped, tag = 'output window, operand 0']
    %9 = vsyncpa [#allocation4], 0
    %s10 = scalar_lea.sflag [#allocation4], 1
    %11 = vsyncpa %s10, 0
    %12 = vsyncpa [#allocation7], 0
    %13 = vsyncpa [#allocation5], 0
    %s14 = scalar_lea.sflag [#allocation5], 1
    %15 = vsyncpa %s14, 0
    loop: start=0, step=1, limit=4
    $region2: #{tpu_custom_call.1} parent=1 // loop_pre_header
      _
    $region3: #{tpu_custom_call.1} parent=1 // loop_header
      %s17 = sphi 0, %s21
      %p18 = scmp.ge.s32.totalorder %s17, 4
      %s27 = sphi 0, %s29
      %s30 = sphi 0, %s27
      %s31 = sphi 0, %s30
      %s47 = sphi 0, %s31
      %s51 = sphi 0, %s51
      %s53 = sphi 0, %s51
      %s54 = sphi 0, %s53
      %s68 = sphi 0, %s54
      %s72 = sphi 0, %s72
      %s74 = sphi 0, %s72
      %s75 = sphi 0, %s74
      %s89 = sphi 0, %s75
      %s93 = sphi 0, %s93
      %s95 = sphi 0, %s93
      %s96 = sphi 0, %s95
      %s110 = sphi 0, %s96
      %s116 = sphi 0, %s118
      %s119 = sphi 0, %s116
      %s120 = sphi 0, %s119
      %s136 = sphi 0, %s120
    $region4: #{tpu_custom_call.1} parent=1 // loop_header_branch
      %20 = sbr.rel (%p18) target = $region8
    $region5: #{tpu_custom_call.1} parent=1 // loop_body
      %s22 = ssub.s32 %s17, 1
      %s23 = ssub.s32 %s17, 2
      %s24 = sadd.s32 %s17, 1
      %s25 = ssub.s32 %s17, %s24
      %p26 = scmp.eq.s32.totalorder %s25, 0
      %s28 = sadd.s32 %s27, 1
      %s29 = scalar_select %p26, %s27, %s28
      %p32 = pneg %p26
      %p33 = scmp.eq.s32.totalorder %s17, 1
      %p34 = por %p32, %p33
      %p35 = scmp.ne.s32.totalorder %s27, %s30
      %p36 = scmp.eq.s32.totalorder %s17, 0
      %p37 = por %p35, %p36
      %p38 = scmp.ne.s32.totalorder %s27, %s30
      %p39 = scmp.eq.s32.totalorder %s22, 1
      %p40 = por %p38, %p39
      %p41 = scmp.ne.s32.totalorder %s30, %s31
      %p42 = scmp.eq.s32.totalorder %s22, 0
      %p43 = por %p41, %p42
      %p44 = scmp.ne.s32.totalorder %s30, %s31
      %p45 = scmp.eq.s32.totalorder %s23, 1
      %p46 = por %p44, %p45
      %p48 = scmp.ne.s32.totalorder %s31, %s47
      %p49 = scmp.eq.s32.totalorder %s23, 0
      %p50 = por %p48, %p49
      %s52 = sadd.s32 %s51, 1
      %p55 = scmp.eq.s32.totalorder %s17, 1
      %p56 = scmp.ne.s32.totalorder %s51, %s53
      %p57 = scmp.eq.s32.totalorder %s17, 0
      %p58 = por %p56, %p57
      %p59 = scmp.ne.s32.totalorder %s51, %s53
      %p60 = scmp.eq.s32.totalorder %s22, 1
      %p61 = por %p59, %p60
      %p62 = scmp.ne.s32.totalorder %s53, %s54
      %p63 = scmp.eq.s32.totalorder %s22, 0
      %p64 = por %p62, %p63
      %p65 = scmp.ne.s32.totalorder %s53, %s54
      %p66 = scmp.eq.s32.totalorder %s23, 1
      %p67 = por %p65, %p66
      %p69 = scmp.ne.s32.totalorder %s54, %s68
      %p70 = scmp.eq.s32.totalorder %s23, 0
      %p71 = por %p69, %p70
      %s73 = sadd.s32 %s72, 1
      %p76 = scmp.eq.s32.totalorder %s17, 1
      %p77 = scmp.ne.s32.totalorder %s72, %s74
      %p78 = scmp.eq.s32.totalorder %s17, 0
      %p79 = por %p77, %p78
      %p80 = scmp.ne.s32.totalorder %s72, %s74
      %p81 = scmp.eq.s32.totalorder %s22, 1
      %p82 = por %p80, %p81
      %p83 = scmp.ne.s32.totalorder %s74, %s75
      %p84 = scmp.eq.s32.totalorder %s22, 0
      %p85 = por %p83, %p84
      %p86 = scmp.ne.s32.totalorder %s74, %s75
      %p87 = scmp.eq.s32.totalorder %s23, 1
      %p88 = por %p86, %p87
      %p90 = scmp.ne.s32.totalorder %s75, %s89
      %p91 = scmp.eq.s32.totalorder %s23, 0
      %p92 = por %p90, %p91
      %s94 = sadd.s32 %s93, 1
      %p97 = scmp.eq.s32.totalorder %s17, 1
      %p98 = scmp.ne.s32.totalorder %s93, %s95
      %p99 = scmp.eq.s32.totalorder %s17, 0
      %p100 = por %p98, %p99
      %p101 = scmp.ne.s32.totalorder %s93, %s95
      %p102 = scmp.eq.s32.totalorder %s22, 1
      %p103 = por %p101, %p102
      %p104 = scmp.ne.s32.totalorder %s95, %s96
      %p105 = scmp.eq.s32.totalorder %s22, 0
      %p106 = por %p104, %p105
      %p107 = scmp.ne.s32.totalorder %s95, %s96
      %p108 = scmp.eq.s32.totalorder %s23, 1
      %p109 = por %p107, %p108
      %p111 = scmp.ne.s32.totalorder %s96, %s110
      %p112 = scmp.eq.s32.totalorder %s23, 0
      %p113 = por %p111, %p112
      %s114 = ssub.s32 %s17, %s24
      %p115 = scmp.eq.s32.totalorder %s114, 0
      %s117 = sadd.s32 %s116, 1
      %s118 = scalar_select %p115, %s116, %s117
      %p121 = pneg %p115
      %p122 = scmp.eq.s32.totalorder %s17, 1
      %p123 = por %p121, %p122
      %p124 = scmp.ne.s32.totalorder %s116, %s119
      %p125 = scmp.eq.s32.totalorder %s17, 0
      %p126 = por %p124, %p125
      %p127 = scmp.ne.s32.totalorder %s116, %s119
      %p128 = scmp.eq.s32.totalorder %s22, 1
      %p129 = por %p127, %p128
      %p130 = scmp.ne.s32.totalorder %s119, %s120
      %p131 = scmp.eq.s32.totalorder %s22, 0
      %p132 = por %p130, %p131
      %p133 = scmp.ne.s32.totalorder %s119, %s120
      %p134 = scmp.eq.s32.totalorder %s23, 1
      %p135 = por %p133, %p134
      %p137 = scmp.ne.s32.totalorder %s120, %s136
      %p138 = scmp.eq.s32.totalorder %s23, 0
      %p139 = por %p137, %p138
      %p140 = scmp.le.s32.totalorder 1, %s17
      %p141 = scmp.lt.s32.totalorder %s17, 3
      %p142 = pnand %p140, %p141
      %p143 = pneg %p142
      // Predicated region
      $region9: #{tpu_custom_call.1} parent=5 // pred_check
        _
      $region10: #{tpu_custom_call.1} parent=5 // pred_check_branch
        %145 = sbr.rel (%p142) target = $region12
      $region11: #{tpu_custom_call.1} parent=5 // pred_region
        %s146 = ssub.s32 %s17, 1
        // Predicated region
        $region13: #{tpu_custom_call.1} parent=11 // pred_check
          %p147 = pneg %p64
        $region14: #{tpu_custom_call.1} parent=11 // pred_check_branch
          %149 = sbr.rel (%p147) target = $region16
        $region15: #{tpu_custom_call.1} parent=11 // pred_region
          _
        $region16: #{tpu_custom_call.1} parent=11 // pred_fallthru
          _
        // Predicated region
        $region17: #{tpu_custom_call.1} parent=11 // pred_check
          %p150 = pneg %p85
        $region18: #{tpu_custom_call.1} parent=11 // pred_check_branch
          %152 = sbr.rel (%p150) target = $region20
        $region19: #{tpu_custom_call.1} parent=11 // pred_region
          _
        $region20: #{tpu_custom_call.1} parent=11 // pred_fallthru
          _
        // Predicated region
        $region21: #{tpu_custom_call.1} parent=11 // pred_check
          %p153 = pneg %p106
        $region22: #{tpu_custom_call.1} parent=11 // pred_check_branch
          %155 = sbr.rel (%p153) target = $region24
        $region23: #{tpu_custom_call.1} parent=11 // pred_region
          %s157 = ssub.s32 3136, 3136
          %158 = vsyncadd [#allocation7], %s157
          %s159 = sshll.u32 [#allocation6], 4
          %s160 = int_to_ptr.vmem [resolvable:$true] %s159
          %165 = dma.hbm_to_vmem [thread:$0]  %s3, 3136, %s160, [#allocation7], 64, 64, 4
        $region24: #{tpu_custom_call.1} parent=11 // pred_fallthru
          _
      $region12: #{tpu_custom_call.1} parent=5 // pred_fallthru
        _
      %p166 = scmp.lt.s32.totalorder %s17, 2
      // Predicated region
      $region25: #{tpu_custom_call.1} parent=5 // pred_check
        %p167 = pneg %p166
      $region26: #{tpu_custom_call.1} parent=5 // pred_check_branch
        %169 = sbr.rel (%p167) target = $region28
      $region27: #{tpu_custom_call.1} parent=5 // pred_region
        // Predicated region
        $region29: #{tpu_custom_call.1} parent=27 // pred_check
          %p170 = pneg %p37
        $region30: #{tpu_custom_call.1} parent=27 // pred_check_branch
          %172 = sbr.rel (%p170) target = $region32
        $region31: #{tpu_custom_call.1} parent=27 // pred_region
          %s173 = sand.u32 %s27, 1
          %s174 = scalar_lea.sflag [#allocation4], %s173
          %s175 = sand.u32 %s27, 1
          %s176 = smul.addr %s175, 64
          %s177 = scalar_lea.vmem [#allocation3], %s176
          %s179 = ssub.s32 1024, 1024
          %180 = vsyncadd %s174, %s179
          %s181 = smul.addr %s17, 8
          %s182 = smul.addr %s181, 128
          %s183 = scalar_lea.hbm %s0, %s182
          %s184 = sshll.u32 %s177, 4
          %s185 = int_to_ptr.vmem [resolvable:$true] %s184
          %190 = dma.hbm_to_vmem [thread:$0]  %s183, 1024, %s185, %s174, 256, 256, 16
        $region32: #{tpu_custom_call.1} parent=27 // pred_fallthru
          _
      $region28: #{tpu_custom_call.1} parent=5 // pred_fallthru
        _
      %p191 = scmp.le.s32.totalorder 1, %s17
      %p192 = scmp.lt.s32.totalorder %s17, 3
      %p193 = pnand %p191, %p192
      %p194 = pneg %p193
      // Predicated region
      $region33: #{tpu_custom_call.1} parent=5 // pred_check
        _
      $region34: #{tpu_custom_call.1} parent=5 // pred_check_branch
        %196 = sbr.rel (%p193) target = $region36
      $region35: #{tpu_custom_call.1} parent=5 // pred_region
        %s197 = ssub.s32 %s17, 1
        %s198 = sand.u32 %s30, 1
        %s199 = scalar_lea.sflag [#allocation4], %s198
        %s200 = sand.u32 %s30, 1
        %s201 = smul.addr %s200, 64
        %s202 = scalar_lea.vmem [#allocation3], %s201
        // Predicated region
        $region37: #{tpu_custom_call.1} parent=35 // pred_check
          %p203 = pneg %p43
        $region38: #{tpu_custom_call.1} parent=35 // pred_check_branch
          %205 = sbr.rel (%p203) target = $region40
        $region39: #{tpu_custom_call.1} parent=35 // pred_region
          %206 = dma.done %s199, 1024
        $region40: #{tpu_custom_call.1} parent=35 // pred_fallthru
          _
        // Predicated region
        $region41: #{tpu_custom_call.1} parent=35 // pred_check
          %p207 = pneg %p106
        $region42: #{tpu_custom_call.1} parent=35 // pred_check_branch
          %209 = sbr.rel (%p207) target = $region44
        $region43: #{tpu_custom_call.1} parent=35 // pred_region
          %210 = dma.done [#allocation7], 3136
        $region44: #{tpu_custom_call.1} parent=35 // pred_fallthru
          _
        %s211 = sand.u32 %s30, 1
        %s212 = scalar_lea.sflag [#allocation4], %s211
        %s213 = sand.u32 %s30, 1
        %s214 = smul.addr %s213, 64
        %s215 = scalar_lea.vmem [#allocation3], %s214
        %p216 = pneg %p43
        %p217 = pneg %p40
        %p218 = pneg %p64
        %p219 = pneg %p61
        %p220 = pneg %p85
        %p221 = pneg %p82
        %p222 = pneg %p106
        %p223 = pneg %p103
        %p224 = pneg %p132
        %p225 = pneg %p129
        %s226 = sand.u32 %s119, 1
        %s227 = scalar_lea.sflag [#allocation5], %s226
        %s228 = sand.u32 %s119, 1
        %s229 = smul.addr %s228, 64
        %s230 = scalar_lea.vmem [#allocation8], %s229
        %v231 = vld [vmem:[%s1] sm:$0xff]
        %v232 = vld [vmem:[%s1 + $0x8] sm:$0xff]
        %v233 = vld [vmem:[%s1 + $0x10] sm:$0xff]
        %v234 = vld [vmem:[%s1 + $0x18] sm:$0xff]
        %v235 = vld [vmem:[%s2] sm:$0xff]
        %v236 = vld [vmem:[%s2 + $0x8] sm:$0xff]
        %v237 = vld [vmem:[%s2 + $0x10] sm:$0xff]
        %v238 = vld [vmem:[%s2 + $0x18] sm:$0xff]
        %v239 = vld [vmem:[%s202] sm:$0xff]
        %v240 = vld [vmem:[%s202 + $0x8] sm:$0xff]
        %v241 = vld [vmem:[%s202 + $0x10] sm:$0xff]
        %v242 = vld [vmem:[%s202 + $0x18] sm:$0xff]
        %v243 = vld [vmem:[%s202 + $0x20] sm:$0xff]
        %v244 = vld [vmem:[%s202 + $0x28] sm:$0xff]
        %v245 = vld [vmem:[%s202 + $0x30] sm:$0xff]
        %v246 = vld [vmem:[%s202 + $0x38] sm:$0xff]
        %v247 = vadd.f32 %v239, %v240
        %248 = vadd.xlane.f32.xlu0 %v247
        %v249 = vpop.xlane.xlu0 %248
        %v250 = vadd.f32 %v241, %v242
        %251 = vadd.xlane.f32.xlu0 %v250
        %v252 = vpop.xlane.xlu0 %251
        %v253 = vadd.f32 %v243, %v244
        %254 = vadd.xlane.f32.xlu0 %v253
        %v255 = vpop.xlane.xlu0 %254
        %v256 = vadd.f32 %v245, %v246
        %257 = vadd.xlane.f32.xlu0 %v256
        %v258 = vpop.xlane.xlu0 %257
        %v259 = vmul.f32 %v249, 0.00390625
        %v260 = vmul.f32 %v252, 0.00390625
        %v261 = vmul.f32 %v255, 0.00390625
        %v262 = vmul.f32 %v258, 0.00390625
        %v263 = vmax.f32 %v239, %v240
        %264 = vmax.xlane.f32.xlu0 %v263
        %v265 = vpop.xlane.xlu0 %264
        %v266 = vmax.f32 %v241, %v242
        %267 = vmax.xlane.f32.xlu0 %v266
        %v268 = vpop.xlane.xlu0 %267
        %v269 = vmax.f32 %v243, %v244
        %270 = vmax.xlane.f32.xlu0 %v269
        %v271 = vpop.xlane.xlu0 %270
        %v272 = vmax.f32 %v245, %v246
        %273 = vmax.xlane.f32.xlu0 %v272
        %v274 = vpop.xlane.xlu0 %273
        %v275 = vmul.f32 %v231, %v259
        %v276 = vmul.f32 %v232, %v260
        %v277 = vmul.f32 %v233, %v261
        %v278 = vmul.f32 %v234, %v262
        %vm279 = vcmask 15360
        %v280 = vsel %vm279, %v275, 0.0
        %v281 = vsel %vm279, %v276, 0.0
        %v282 = vadd.f32 %v280, %v281
        %v283 = vsel %vm279, %v277, 0.0
        %v284 = vadd.f32 %v282, %v283
        %v285 = vsel %vm279, %v278, 0.0
        %v286 = vadd.f32 %v284, %v285
        %v287 = vrot.slane %v286, 4
        %v288 = vadd.f32 %v286, %v287
        %v289 = vrot.slane %v288, 2
        %v290 = vadd.f32 %v288, %v289
        %v291 = vrot.slane %v290, 1
        %v292 = vadd.f32 %v290, %v291
        %v293 = vmax.f32 %v292, 0.0
        %v294 = vmul.f32 %v235, %v293
        %v295 = vmul.f32 %v236, %v293
        %v296 = vmul.f32 %v237, %v293
        %v297 = vmul.f32 %v238, %v293
        %v298 = vsel %vm279, %v294, 0.0
        %299 = vadd.xlane.f32.xlu0 %v298
        %v300 = vpop.xlane.xlu0 %299
        %v301 = vsel %vm279, %v295, 0.0
        %302 = vadd.xlane.f32.xlu0 %v301
        %v303 = vpop.xlane.xlu0 %302
        %v304 = vsel %vm279, %v296, 0.0
        %305 = vadd.xlane.f32.xlu0 %v304
        %v306 = vpop.xlane.xlu0 %305
        %v307 = vsel %vm279, %v297, 0.0
        %308 = vadd.xlane.f32.xlu0 %v307
        %v309 = vpop.xlane.xlu0 %308
        %v310 = vmul.f32 %v231, %v265
        %v311 = vmul.f32 %v232, %v268
        %v312 = vmul.f32 %v233, %v271
        %v313 = vmul.f32 %v234, %v274
        %v314 = vsel %vm279, %v310, 0.0
        %v315 = vsel %vm279, %v311, 0.0
        %v316 = vadd.f32 %v314, %v315
        %v317 = vsel %vm279, %v312, 0.0
        %v318 = vadd.f32 %v316, %v317
        %v319 = vsel %vm279, %v313, 0.0
        %v320 = vadd.f32 %v318, %v319
        %v321 = vrot.slane %v320, 4
        %v322 = vadd.f32 %v320, %v321
        %v323 = vrot.slane %v322, 2
        %v324 = vadd.f32 %v322, %v323
        %v325 = vrot.slane %v324, 1
        %v326 = vadd.f32 %v324, %v325
        %v327 = vmax.f32 %v326, 0.0
        %v328 = vmul.f32 %v235, %v327
        %v329 = vmul.f32 %v236, %v327
        %v330 = vmul.f32 %v237, %v327
        %v331 = vmul.f32 %v238, %v327
        %v332 = vsel %vm279, %v328, 0.0
        %333 = vadd.xlane.f32.xlu0 %v332
        %v334 = vpop.xlane.xlu0 %333
        %v335 = vsel %vm279, %v329, 0.0
        %336 = vadd.xlane.f32.xlu0 %v335
        %v337 = vpop.xlane.xlu0 %336
        %v338 = vsel %vm279, %v330, 0.0
        %339 = vadd.xlane.f32.xlu0 %v338
        %v340 = vpop.xlane.xlu0 %339
        %v341 = vsel %vm279, %v331, 0.0
        %342 = vadd.xlane.f32.xlu0 %v341
        %v343 = vpop.xlane.xlu0 %342
        %v344 = vadd.f32 %v300, %v334
        %v345 = vadd.f32 %v303, %v337
        %v346 = vadd.f32 %v306, %v340
        %v347 = vadd.f32 %v309, %v343
        %v348 = vxor.u32 %v344, 2147483648
        %v349 = vxor.u32 %v345, 2147483648
        %v350 = vxor.u32 %v346, 2147483648
        %v351 = vxor.u32 %v347, 2147483648
        %v352 = vmul.f32 %v348, 1.442695
        %v353 = vpow.pop %v352
        %v354 = vmul.f32 %v349, 1.442695
        %v355 = vpow.pop %v354
        %v356 = vmul.f32 %v350, 1.442695
        %v357 = vpow.pop %v356
        %v358 = vmul.f32 %v351, 1.442695
        %v359 = vpow.pop %v358
        %v360 = vadd.f32 %v353, 1.0
        %v361 = vadd.f32 %v355, 1.0
        %v362 = vadd.f32 %v357, 1.0
        %v363 = vadd.f32 %v359, 1.0
        %v364 = vrcp.pop %v360
        %v365 = vmul.f32 1.0, %v364
        %v366 = vrcp.pop %v361
        %v367 = vmul.f32 1.0, %v366
        %v368 = vrcp.pop %v362
        %v369 = vmul.f32 1.0, %v368
        %v370 = vrcp.pop %v363
        %v371 = vmul.f32 1.0, %v370
        %v372 = vmul.f32 %v239, %v365
        %v373 = vmul.f32 %v240, %v365
        %v374 = vmul.f32 %v241, %v367
        %v375 = vmul.f32 %v242, %v367
        %v376 = vmul.f32 %v243, %v369
        %v377 = vmul.f32 %v244, %v369
        %v378 = vmul.f32 %v245, %v371
        %v379 = vmul.f32 %v246, %v371
        %380 = vst [vmem:[%s230] sm:$0xff] %v372
        %381 = vst [vmem:[%s230 + $0x8] sm:$0xff] %v373
        %382 = vst [vmem:[%s230 + $0x10] sm:$0xff] %v374
        %383 = vst [vmem:[%s230 + $0x18] sm:$0xff] %v375
        %384 = vst [vmem:[%s230 + $0x20] sm:$0xff] %v376
        %385 = vst [vmem:[%s230 + $0x28] sm:$0xff] %v377
        %386 = vst [vmem:[%s230 + $0x30] sm:$0xff] %v378
        %387 = vst [vmem:[%s230 + $0x38] sm:$0xff] %v379
        %v388 = vadd.f32 %v372, %v374
        %v389 = vadd.f32 %v388, %v376
        %v390 = vadd.f32 %v389, %v378
        %v391 = vrot.slane %v390, 4
        %v392 = vadd.f32 %v390, %v391
        %v393 = vrot.slane %v392, 2
        %v394 = vadd.f32 %v392, %v393
        %v395 = vrot.slane %v394, 1
        %v396 = vadd.f32 %v394, %v395
        %v397 = vadd.f32 %v373, %v375
        %v398 = vadd.f32 %v397, %v377
        %v399 = vadd.f32 %v398, %v379
        %v400 = vrot.slane %v399, 4
        %v401 = vadd.f32 %v399, %v400
        %v402 = vrot.slane %v401, 2
        %v403 = vadd.f32 %v401, %v402
        %v404 = vrot.slane %v403, 1
        %v405 = vadd.f32 %v403, %v404
        %v406 = vmul.f32 %v396, 0.03125
        %v407 = vmul.f32 %v405, 0.03125
        %v410 = vcombine.low %v406, %v407
        %v412 = vunpack.c.l.s4 1966171168
        %v413 = vunpack.c.0.s8 %v412
        %v414 = vlaneseq
        %v415 = vshrl.u32 %v414, 7
        %v416 = vsub.s32 %v413, %v415
        %v417 = vrot.slane %v410, %v416
        %v419 = vunpack.c.l.s4 1966171168
        %v420 = vunpack.c.0.s8 %v419
        %v421 = vlaneseq
        %v422 = vshrl.u32 %v421, 7
        %v423 = vsub.s32 %v420, %v422
        %v424 = vrot.slane %v417, %v423
        %v426 = vlaneseq
        %vm427 = vcmp.ge.s32.totalorder %v426, 0
        %vm428 = vcmp.lt.s32.totalorder %v426, 256
        %vm429 = vmand %vm427, %vm428
        %430 = vst.msk [vmem:[#allocation2] ss:$2 sm:$0x3] %vm429, %v424
        %v431 = vmax.f32 %v372, %v376
        %v432 = vmax.f32 %v374, %v378
        %v433 = vmax.f32 %v431, %v432
        %v434 = vrot.slane %v433, 4
        %v435 = vmax.f32 %v433, %v434
        %v436 = vrot.slane %v435, 2
        %v437 = vmax.f32 %v435, %v436
        %v438 = vrot.slane %v437, 1
        %v439 = vmax.f32 %v437, %v438
        %v440 = vmax.f32 %v373, %v377
        %v441 = vmax.f32 %v375, %v379
        %v442 = vmax.f32 %v440, %v441
        %v443 = vrot.slane %v442, 4
        %v444 = vmax.f32 %v442, %v443
        %v445 = vrot.slane %v444, 2
        %v446 = vmax.f32 %v444, %v445
        %v447 = vrot.slane %v446, 1
        %v448 = vmax.f32 %v446, %v447
        %v451 = vcombine.low %v439, %v448
        %v453 = vunpack.c.l.s4 1966171168
        %v454 = vunpack.c.0.s8 %v453
        %v455 = vlaneseq
        %v456 = vshrl.u32 %v455, 7
        %v457 = vsub.s32 %v454, %v456
        %v458 = vrot.slane %v451, %v457
        %v460 = vunpack.c.l.s4 1966171168
        %v461 = vunpack.c.0.s8 %v460
        %v462 = vlaneseq
        %v463 = vshrl.u32 %v462, 7
        %v464 = vsub.s32 %v461, %v463
        %v465 = vrot.slane %v458, %v464
        %s467 = scalar_lea.vmem [#allocation2], 1
        %468 = vst.msk [vmem:[%s467] ss:$2 sm:$0x3] %vm429, %v465
        %v469 = vld [vmem:[#allocation2] sm:$0xf]
        %v472 = vunpack.c.l.s4 1983009808
        %v473 = vunpack.c.0.s8 %v472
        %v474 = vlaneseq
        %v475 = vshrl.u32 %v474, 7
        %v476 = vsub.s32 %v473, %v475
        %v477 = vrot.slane %v469, %v476
        %v478 = vcombine.high %v477, %v477
        %481 = vrot.lane.b32.xlu0 %v477, 51
        %v482 = vpop.permute.xlu0 %481
        %483 = vrot.lane.b32.xlu0 %v478, 51
        %v484 = vpop.permute.xlu0 %483
        %v485 = vlaneseq
        %v486 = vand.u32 %v485, 127
        %vm487 = vcmp.lt.s32.totalorder %v486, 51
        %v488 = vsel %vm487, %v482, %v484
        %v489 = vsel %vm487, %v484, %v482
        %v490 = vld [vmem:[#allocation6] sm:$0xf]
        %v493 = vcombine.low %v489, %v488
        %v495 = vunpack.c.l.s4 1983009808
        %v496 = vunpack.c.0.s8 %v495
        %v497 = vlaneseq
        %v498 = vshrl.u32 %v497, 7
        %v499 = vsub.s32 %v496, %v498
        %v500 = vrot.slane %v493, %v499
        %v502 = vmul.f32 %v490, %v500
        %v503 = vadd.f32 %v502, 0.0
        %504 = vrot.lane.b32.xlu0 %v477, 50
        %v505 = vpop.permute.xlu0 %504
        %506 = vrot.lane.b32.xlu0 %v478, 50
        %v507 = vpop.permute.xlu0 %506
        %vm508 = vcmp.lt.s32.totalorder %v486, 50
        %v509 = vsel %vm508, %v505, %v507
        %v510 = vsel %vm508, %v507, %v505
        %s511 = scalar_lea.vmem [#allocation6], 4
        %v512 = vld [vmem:[%s511] sm:$0xf]
        %v515 = vcombine.low %v510, %v509
        %v517 = vunpack.c.l.s4 1983009808
        %v518 = vunpack.c.0.s8 %v517
        %v519 = vlaneseq
        %v520 = vshrl.u32 %v519, 7
        %v521 = vsub.s32 %v518, %v520
        %v522 = vrot.slane %v515, %v521
        %v524 = vmul.f32 %v512, %v522
        %v525 = vadd.f32 %v503, %v524
        %526 = vrot.lane.b32.xlu0 %v477, 49
        %v527 = vpop.permute.xlu0 %526
        %528 = vrot.lane.b32.xlu0 %v478, 49
        %v529 = vpop.permute.xlu0 %528
        %vm530 = vcmp.lt.s32.totalorder %v486, 49
        %v531 = vsel %vm530, %v527, %v529
        %v532 = vsel %vm530, %v529, %v527
        %s533 = scalar_lea.vmem [#allocation6], 8
        %v534 = vld [vmem:[%s533] sm:$0xf]
        %v537 = vcombine.low %v532, %v531
        %v539 = vunpack.c.l.s4 1983009808
        %v540 = vunpack.c.0.s8 %v539
        %v541 = vlaneseq
        %v542 = vshrl.u32 %v541, 7
        %v543 = vsub.s32 %v540, %v542
        %v544 = vrot.slane %v537, %v543
        %v546 = vmul.f32 %v534, %v544
        %v547 = vadd.f32 %v525, %v546
        %548 = vrot.lane.b32.xlu0 %v477, 48
        %v549 = vpop.permute.xlu0 %548
        %550 = vrot.lane.b32.xlu0 %v478, 48
        %v551 = vpop.permute.xlu0 %550
        %vm552 = vcmp.lt.s32.totalorder %v486, 48
        %v553 = vsel %vm552, %v549, %v551
        %v554 = vsel %vm552, %v551, %v549
        %s555 = scalar_lea.vmem [#allocation6], 12
        %v556 = vld [vmem:[%s555] sm:$0xf]
        %v559 = vcombine.low %v554, %v553
        %v561 = vunpack.c.l.s4 1983009808
        %v562 = vunpack.c.0.s8 %v561
        %v563 = vlaneseq
        %v564 = vshrl.u32 %v563, 7
        %v565 = vsub.s32 %v562, %v564
        %v566 = vrot.slane %v559, %v565
        %v568 = vmul.f32 %v556, %v566
        %v569 = vadd.f32 %v547, %v568
        %570 = vrot.lane.b32.xlu0 %v477, 47
        %v571 = vpop.permute.xlu0 %570
        %572 = vrot.lane.b32.xlu0 %v478, 47
        %v573 = vpop.permute.xlu0 %572
        %vm574 = vcmp.lt.s32.totalorder %v486, 47
        %v575 = vsel %vm574, %v571, %v573
        %v576 = vsel %vm574, %v573, %v571
        %s577 = scalar_lea.vmem [#allocation6], 16
        %v578 = vld [vmem:[%s577] sm:$0xf]
        %v581 = vcombine.low %v576, %v575
        %v583 = vunpack.c.l.s4 1983009808
        %v584 = vunpack.c.0.s8 %v583
        %v585 = vlaneseq
        %v586 = vshrl.u32 %v585, 7
        %v587 = vsub.s32 %v584, %v586
        %v588 = vrot.slane %v581, %v587
        %v590 = vmul.f32 %v578, %v588
        %v591 = vadd.f32 %v569, %v590
        %592 = vrot.lane.b32.xlu0 %v477, 46
        %v593 = vpop.permute.xlu0 %592
        %594 = vrot.lane.b32.xlu0 %v478, 46
        %v595 = vpop.permute.xlu0 %594
        %vm596 = vcmp.lt.s32.totalorder %v486, 46
        %v597 = vsel %vm596, %v593, %v595
        %v598 = vsel %vm596, %v595, %v593
        %s599 = scalar_lea.vmem [#allocation6], 20
        %v600 = vld [vmem:[%s599] sm:$0xf]
        %v603 = vcombine.low %v598, %v597
        %v605 = vunpack.c.l.s4 1983009808
        %v606 = vunpack.c.0.s8 %v605
        %v607 = vlaneseq
        %v608 = vshrl.u32 %v607, 7
        %v609 = vsub.s32 %v606, %v608
        %v610 = vrot.slane %v603, %v609
        %v612 = vmul.f32 %v600, %v610
        %v613 = vadd.f32 %v591, %v612
        %614 = vrot.lane.b32.xlu0 %v477, 45
        %v615 = vpop.permute.xlu0 %614
        %616 = vrot.lane.b32.xlu0 %v478, 45
        %v617 = vpop.permute.xlu0 %616
        %vm618 = vcmp.lt.s32.totalorder %v486, 45
        %v619 = vsel %vm618, %v615, %v617
        %v620 = vsel %vm618, %v617, %v615
        %s621 = scalar_lea.vmem [#allocation6], 24
        %v622 = vld [vmem:[%s621] sm:$0xf]
        %v625 = vcombine.low %v620, %v619
        %v627 = vunpack.c.l.s4 1983009808
        %v628 = vunpack.c.0.s8 %v627
        %v629 = vlaneseq
        %v630 = vshrl.u32 %v629, 7
        %v631 = vsub.s32 %v628, %v630
        %v632 = vrot.slane %v625, %v631
        %v634 = vmul.f32 %v622, %v632
        %v635 = vadd.f32 %v613, %v634
        %636 = vrot.lane.b32.xlu0 %v477, 35
        %v637 = vpop.permute.xlu0 %636
        %638 = vrot.lane.b32.xlu0 %v478, 35
        %v639 = vpop.permute.xlu0 %638
        %vm640 = vcmp.lt.s32.totalorder %v486, 35
        %v641 = vsel %vm640, %v637, %v639
        %v642 = vsel %vm640, %v639, %v637
        %s643 = scalar_lea.vmem [#allocation6], 28
        %v644 = vld [vmem:[%s643] sm:$0xf]
        %v647 = vcombine.low %v642, %v641
        %v649 = vunpack.c.l.s4 1983009808
        %v650 = vunpack.c.0.s8 %v649
        %v651 = vlaneseq
        %v652 = vshrl.u32 %v651, 7
        %v653 = vsub.s32 %v650, %v652
        %v654 = vrot.slane %v647, %v653
        %v656 = vmul.f32 %v644, %v654
        %v657 = vadd.f32 %v635, %v656
        %658 = vrot.lane.b32.xlu0 %v477, 34
        %v659 = vpop.permute.xlu0 %658
        %660 = vrot.lane.b32.xlu0 %v478, 34
        %v661 = vpop.permute.xlu0 %660
        %vm662 = vcmp.lt.s32.totalorder %v486, 34
        %v663 = vsel %vm662, %v659, %v661
        %v664 = vsel %vm662, %v661, %v659
        %s665 = scalar_lea.vmem [#allocation6], 32
        %v666 = vld [vmem:[%s665] sm:$0xf]
        %v669 = vcombine.low %v664, %v663
        %v671 = vunpack.c.l.s4 1983009808
        %v672 = vunpack.c.0.s8 %v671
        %v673 = vlaneseq
        %v674 = vshrl.u32 %v673, 7
        %v675 = vsub.s32 %v672, %v674
        %v676 = vrot.slane %v669, %v675
        %v678 = vmul.f32 %v666, %v676
        %v679 = vadd.f32 %v657, %v678
        %680 = vrot.lane.b32.xlu0 %v477, 33
        %v681 = vpop.permute.xlu0 %680
        %682 = vrot.lane.b32.xlu0 %v478, 33
        %v683 = vpop.permute.xlu0 %682
        %vm684 = vcmp.lt.s32.totalorder %v486, 33
        %v685 = vsel %vm684, %v681, %v683
        %v686 = vsel %vm684, %v683, %v681
        %s687 = scalar_lea.vmem [#allocation6], 36
        %v688 = vld [vmem:[%s687] sm:$0xf]
        %v691 = vcombine.low %v686, %v685
        %v693 = vunpack.c.l.s4 1983009808
        %v694 = vunpack.c.0.s8 %v693
        %v695 = vlaneseq
        %v696 = vshrl.u32 %v695, 7
        %v697 = vsub.s32 %v694, %v696
        %v698 = vrot.slane %v691, %v697
        %v700 = vmul.f32 %v688, %v698
        %v701 = vadd.f32 %v679, %v700
        %702 = vrot.lane.b32.xlu0 %v477, 32
        %v703 = vpop.permute.xlu0 %702
        %704 = vrot.lane.b32.xlu0 %v478, 32
        %v705 = vpop.permute.xlu0 %704
        %vm706 = vcmp.lt.s32.totalorder %v486, 32
        %v707 = vsel %vm706, %v703, %v705
        %v708 = vsel %vm706, %v705, %v703
        %s709 = scalar_lea.vmem [#allocation6], 40
        %v710 = vld [vmem:[%s709] sm:$0xf]
        %v713 = vcombine.low %v708, %v707
        %v715 = vunpack.c.l.s4 1983009808
        %v716 = vunpack.c.0.s8 %v715
        %v717 = vlaneseq
        %v718 = vshrl.u32 %v717, 7
        %v719 = vsub.s32 %v716, %v718
        %v720 = vrot.slane %v713, %v719
        %v722 = vmul.f32 %v710, %v720
        %v723 = vadd.f32 %v701, %v722
        %724 = vrot.lane.b32.xlu0 %v477, 31
        %v725 = vpop.permute.xlu0 %724
        %726 = vrot.lane.b32.xlu0 %v478, 31
        %v727 = vpop.permute.xlu0 %726
        %vm728 = vcmp.lt.s32.totalorder %v486, 31
        %v729 = vsel %vm728, %v725, %v727
        %v730 = vsel %vm728, %v727, %v725
        %s731 = scalar_lea.vmem [#allocation6], 44
        %v732 = vld [vmem:[%s731] sm:$0xf]
        %v735 = vcombine.low %v730, %v729
        %v737 = vunpack.c.l.s4 1983009808
        %v738 = vunpack.c.0.s8 %v737
        %v739 = vlaneseq
        %v740 = vshrl.u32 %v739, 7
        %v741 = vsub.s32 %v738, %v740
        %v742 = vrot.slane %v735, %v741
        %v744 = vmul.f32 %v732, %v742
        %v745 = vadd.f32 %v723, %v744
        %746 = vrot.lane.b32.xlu0 %v477, 30
        %v747 = vpop.permute.xlu0 %746
        %748 = vrot.lane.b32.xlu0 %v478, 30
        %v749 = vpop.permute.xlu0 %748
        %vm750 = vcmp.lt.s32.totalorder %v486, 30
        %v751 = vsel %vm750, %v747, %v749
        %v752 = vsel %vm750, %v749, %v747
        %s753 = scalar_lea.vmem [#allocation6], 48
        %v754 = vld [vmem:[%s753] sm:$0xf]
        %v757 = vcombine.low %v752, %v751
        %v759 = vunpack.c.l.s4 1983009808
        %v760 = vunpack.c.0.s8 %v759
        %v761 = vlaneseq
        %v762 = vshrl.u32 %v761, 7
        %v763 = vsub.s32 %v760, %v762
        %v764 = vrot.slane %v757, %v763
        %v766 = vmul.f32 %v754, %v764
        %v767 = vadd.f32 %v745, %v766
        %768 = vrot.lane.b32.xlu0 %v477, 29
        %v769 = vpop.permute.xlu0 %768
        %770 = vrot.lane.b32.xlu0 %v478, 29
        %v771 = vpop.permute.xlu0 %770
        %vm772 = vcmp.lt.s32.totalorder %v486, 29
        %v773 = vsel %vm772, %v769, %v771
        %v774 = vsel %vm772, %v771, %v769
        %s775 = scalar_lea.vmem [#allocation6], 52
        %v776 = vld [vmem:[%s775] sm:$0xf]
        %v779 = vcombine.low %v774, %v773
        %v781 = vunpack.c.l.s4 1983009808
        %v782 = vunpack.c.0.s8 %v781
        %v783 = vlaneseq
        %v784 = vshrl.u32 %v783, 7
        %v785 = vsub.s32 %v782, %v784
        %v786 = vrot.slane %v779, %v785
        %v788 = vmul.f32 %v776, %v786
        %v789 = vadd.f32 %v767, %v788
        %790 = vrot.lane.b32.xlu0 %v477, 19
        %v791 = vpop.permute.xlu0 %790
        %792 = vrot.lane.b32.xlu0 %v478, 19
        %v793 = vpop.permute.xlu0 %792
        %vm794 = vcmp.lt.s32.totalorder %v486, 19
        %v795 = vsel %vm794, %v791, %v793
        %v796 = vsel %vm794, %v793, %v791
        %s797 = scalar_lea.vmem [#allocation6], 56
        %v798 = vld [vmem:[%s797] sm:$0xf]
        %v801 = vcombine.low %v796, %v795
        %v803 = vunpack.c.l.s4 1983009808
        %v804 = vunpack.c.0.s8 %v803
        %v805 = vlaneseq
        %v806 = vshrl.u32 %v805, 7
        %v807 = vsub.s32 %v804, %v806
        %v808 = vrot.slane %v801, %v807
        %v810 = vmul.f32 %v798, %v808
        %v811 = vadd.f32 %v789, %v810
        %812 = vrot.lane.b32.xlu0 %v477, 18
        %v813 = vpop.permute.xlu0 %812
        %814 = vrot.lane.b32.xlu0 %v478, 18
        %v815 = vpop.permute.xlu0 %814
        %vm816 = vcmp.lt.s32.totalorder %v486, 18
        %v817 = vsel %vm816, %v813, %v815
        %v818 = vsel %vm816, %v815, %v813
        %s819 = scalar_lea.vmem [#allocation6], 60
        %v820 = vld [vmem:[%s819] sm:$0xf]
        %v823 = vcombine.low %v818, %v817
        %v825 = vunpack.c.l.s4 1983009808
        %v826 = vunpack.c.0.s8 %v825
        %v827 = vlaneseq
        %v828 = vshrl.u32 %v827, 7
        %v829 = vsub.s32 %v826, %v828
        %v830 = vrot.slane %v823, %v829
        %v832 = vmul.f32 %v820, %v830
        %v833 = vadd.f32 %v811, %v832
        %834 = vrot.lane.b32.xlu0 %v477, 17
        %v835 = vpop.permute.xlu0 %834
        %836 = vrot.lane.b32.xlu0 %v478, 17
        %v837 = vpop.permute.xlu0 %836
        %vm838 = vcmp.lt.s32.totalorder %v486, 17
        %v839 = vsel %vm838, %v835, %v837
        %v840 = vsel %vm838, %v837, %v835
        %s841 = scalar_lea.vmem [#allocation6], 64
        %v842 = vld [vmem:[%s841] sm:$0xf]
        %v845 = vcombine.low %v840, %v839
        %v847 = vunpack.c.l.s4 1983009808
        %v848 = vunpack.c.0.s8 %v847
        %v849 = vlaneseq
        %v850 = vshrl.u32 %v849, 7
        %v851 = vsub.s32 %v848, %v850
        %v852 = vrot.slane %v845, %v851
        %v854 = vmul.f32 %v842, %v852
        %v855 = vadd.f32 %v833, %v854
        %856 = vrot.lane.b32.xlu0 %v477, 16
        %v857 = vpop.permute.xlu0 %856
        %858 = vrot.lane.b32.xlu0 %v478, 16
        %v859 = vpop.permute.xlu0 %858
        %vm860 = vcmp.lt.s32.totalorder %v486, 16
        %v861 = vsel %vm860, %v857, %v859
        %v862 = vsel %vm860, %v859, %v857
        %s863 = scalar_lea.vmem [#allocation6], 68
        %v864 = vld [vmem:[%s863] sm:$0xf]
        %v867 = vcombine.low %v862, %v861
        %v869 = vunpack.c.l.s4 1983009808
        %v870 = vunpack.c.0.s8 %v869
        %v871 = vlaneseq
        %v872 = vshrl.u32 %v871, 7
        %v873 = vsub.s32 %v870, %v872
        %v874 = vrot.slane %v867, %v873
        %v876 = vmul.f32 %v864, %v874
        %v877 = vadd.f32 %v855, %v876
        %878 = vrot.lane.b32.xlu0 %v477, 15
        %v879 = vpop.permute.xlu0 %878
        %880 = vrot.lane.b32.xlu0 %v478, 15
        %v881 = vpop.permute.xlu0 %880
        %vm882 = vcmp.lt.s32.totalorder %v486, 15
        %v883 = vsel %vm882, %v879, %v881
        %v884 = vsel %vm882, %v881, %v879
        %s885 = scalar_lea.vmem [#allocation6], 72
        %v886 = vld [vmem:[%s885] sm:$0xf]
        %v889 = vcombine.low %v884, %v883
        %v891 = vunpack.c.l.s4 1983009808
        %v892 = vunpack.c.0.s8 %v891
        %v893 = vlaneseq
        %v894 = vshrl.u32 %v893, 7
        %v895 = vsub.s32 %v892, %v894
        %v896 = vrot.slane %v889, %v895
        %v898 = vmul.f32 %v886, %v896
        %v899 = vadd.f32 %v877, %v898
        %900 = vrot.lane.b32.xlu0 %v477, 14
        %v901 = vpop.permute.xlu0 %900
        %902 = vrot.lane.b32.xlu0 %v478, 14
        %v903 = vpop.permute.xlu0 %902
        %vm904 = vcmp.lt.s32.totalorder %v486, 14
        %v905 = vsel %vm904, %v901, %v903
        %v906 = vsel %vm904, %v903, %v901
        %s907 = scalar_lea.vmem [#allocation6], 76
        %v908 = vld [vmem:[%s907] sm:$0xf]
        %v911 = vcombine.low %v906, %v905
        %v913 = vunpack.c.l.s4 1983009808
        %v914 = vunpack.c.0.s8 %v913
        %v915 = vlaneseq
        %v916 = vshrl.u32 %v915, 7
        %v917 = vsub.s32 %v914, %v916
        %v918 = vrot.slane %v911, %v917
        %v920 = vmul.f32 %v908, %v918
        %v921 = vadd.f32 %v899, %v920
        %922 = vrot.lane.b32.xlu0 %v477, 13
        %v923 = vpop.permute.xlu0 %922
        %924 = vrot.lane.b32.xlu0 %v478, 13
        %v925 = vpop.permute.xlu0 %924
        %vm926 = vcmp.lt.s32.totalorder %v486, 13
        %v927 = vsel %vm926, %v923, %v925
        %v928 = vsel %vm926, %v925, %v923
        %s929 = scalar_lea.vmem [#allocation6], 80
        %v930 = vld [vmem:[%s929] sm:$0xf]
        %v933 = vcombine.low %v928, %v927
        %v935 = vunpack.c.l.s4 1983009808
        %v936 = vunpack.c.0.s8 %v935
        %v937 = vlaneseq
        %v938 = vshrl.u32 %v937, 7
        %v939 = vsub.s32 %v936, %v938
        %v940 = vrot.slane %v933, %v939
        %v942 = vmul.f32 %v930, %v940
        %v943 = vadd.f32 %v921, %v942
        %944 = vrot.lane.b32.xlu0 %v477, 3
        %v945 = vpop.permute.xlu0 %944
        %946 = vrot.lane.b32.xlu0 %v478, 3
        %v947 = vpop.permute.xlu0 %946
        %vm948 = vcmp.lt.s32.totalorder %v486, 3
        %v949 = vsel %vm948, %v945, %v947
        %v950 = vsel %vm948, %v947, %v945
        %s951 = scalar_lea.vmem [#allocation6], 84
        %v952 = vld [vmem:[%s951] sm:$0xf]
        %v955 = vcombine.low %v950, %v949
        %v957 = vunpack.c.l.s4 1983009808
        %v958 = vunpack.c.0.s8 %v957
        %v959 = vlaneseq
        %v960 = vshrl.u32 %v959, 7
        %v961 = vsub.s32 %v958, %v960
        %v962 = vrot.slane %v955, %v961
        %v964 = vmul.f32 %v952, %v962
        %v965 = vadd.f32 %v943, %v964
        %966 = vrot.lane.b32.xlu0 %v477, 2
        %v967 = vpop.permute.xlu0 %966
        %968 = vrot.lane.b32.xlu0 %v478, 2
        %v969 = vpop.permute.xlu0 %968
        %vm970 = vcmp.lt.s32.totalorder %v486, 2
        %v971 = vsel %vm970, %v967, %v969
        %v972 = vsel %vm970, %v969, %v967
        %s973 = scalar_lea.vmem [#allocation6], 88
        %v974 = vld [vmem:[%s973] sm:$0xf]
        %v977 = vcombine.low %v972, %v971
        %v979 = vunpack.c.l.s4 1983009808
        %v980 = vunpack.c.0.s8 %v979
        %v981 = vlaneseq
        %v982 = vshrl.u32 %v981, 7
        %v983 = vsub.s32 %v980, %v982
        %v984 = vrot.slane %v977, %v983
        %v986 = vmul.f32 %v974, %v984
        %v987 = vadd.f32 %v965, %v986
        %988 = vrot.lane.b32.xlu0 %v477, 1
        %v989 = vpop.permute.xlu0 %988
        %990 = vrot.lane.b32.xlu0 %v478, 1
        %v991 = vpop.permute.xlu0 %990
        %vm992 = vcmp.lt.s32.totalorder %v486, 1
        %v993 = vsel %vm992, %v989, %v991
        %v994 = vsel %vm992, %v991, %v989
        %s995 = scalar_lea.vmem [#allocation6], 92
        %v996 = vld [vmem:[%s995] sm:$0xf]
        %v999 = vcombine.low %v994, %v993
        %v1001 = vunpack.c.l.s4 1983009808
        %v1002 = vunpack.c.0.s8 %v1001
        %v1003 = vlaneseq
        %v1004 = vshrl.u32 %v1003, 7
        %v1005 = vsub.s32 %v1002, %v1004
        %v1006 = vrot.slane %v999, %v1005
        %v1008 = vmul.f32 %v996, %v1006
        %v1009 = vadd.f32 %v987, %v1008
        %s1010 = scalar_lea.vmem [#allocation6], 96
        %v1011 = vld [vmem:[%s1010] sm:$0xf]
        %v1012 = vmul.f32 %v1011, %v469
        %v1013 = vadd.f32 %v1009, %v1012
        %1014 = vrot.lane.b32.xlu0 %v477, 127
        %v1015 = vpop.permute.xlu0 %1014
        %1016 = vrot.lane.b32.xlu0 %v478, 127
        %v1017 = vpop.permute.xlu0 %1016
        %vm1018 = vcmp.lt.s32.totalorder %v486, 127
        %v1019 = vsel %vm1018, %v1015, %v1017
        %v1020 = vsel %vm1018, %v1017, %v1015
        %s1021 = scalar_lea.vmem [#allocation6], 100
        %v1022 = vld [vmem:[%s1021] sm:$0xf]
        %v1025 = vcombine.low %v1019, %v1020
        %v1027 = vunpack.c.l.s4 1983009808
        %v1028 = vunpack.c.0.s8 %v1027
        %v1029 = vlaneseq
        %v1030 = vshrl.u32 %v1029, 7
        %v1031 = vsub.s32 %v1028, %v1030
        %v1032 = vrot.slane %v1025, %v1031
        %v1034 = vmul.f32 %v1022, %v1032
        %v1035 = vadd.f32 %v1013, %v1034
        %1036 = vrot.lane.b32.xlu0 %v477, 126
        %v1037 = vpop.permute.xlu0 %1036
        %1038 = vrot.lane.b32.xlu0 %v478, 126
        %v1039 = vpop.permute.xlu0 %1038
        %vm1040 = vcmp.lt.s32.totalorder %v486, 126
        %v1041 = vsel %vm1040, %v1037, %v1039
        %v1042 = vsel %vm1040, %v1039, %v1037
        %s1043 = scalar_lea.vmem [#allocation6], 104
        %v1044 = vld [vmem:[%s1043] sm:$0xf]
        %v1047 = vcombine.low %v1041, %v1042
        %v1049 = vunpack.c.l.s4 1983009808
        %v1050 = vunpack.c.0.s8 %v1049
        %v1051 = vlaneseq
        %v1052 = vshrl.u32 %v1051, 7
        %v1053 = vsub.s32 %v1050, %v1052
        %v1054 = vrot.slane %v1047, %v1053
        %v1056 = vmul.f32 %v1044, %v1054
        %v1057 = vadd.f32 %v1035, %v1056
        %1058 = vrot.lane.b32.xlu0 %v477, 125
        %v1059 = vpop.permute.xlu0 %1058
        %1060 = vrot.lane.b32.xlu0 %v478, 125
        %v1061 = vpop.permute.xlu0 %1060
        %vm1062 = vcmp.lt.s32.totalorder %v486, 125
        %v1063 = vsel %vm1062, %v1059, %v1061
        %v1064 = vsel %vm1062, %v1061, %v1059
        %s1065 = scalar_lea.vmem [#allocation6], 108
        %v1066 = vld [vmem:[%s1065] sm:$0xf]
        %v1069 = vcombine.low %v1063, %v1064
        %v1071 = vunpack.c.l.s4 1983009808
        %v1072 = vunpack.c.0.s8 %v1071
        %v1073 = vlaneseq
        %v1074 = vshrl.u32 %v1073, 7
        %v1075 = vsub.s32 %v1072, %v1074
        %v1076 = vrot.slane %v1069, %v1075
        %v1078 = vmul.f32 %v1066, %v1076
        %v1079 = vadd.f32 %v1057, %v1078
        %1080 = vrot.lane.b32.xlu0 %v477, 115
        %v1081 = vpop.permute.xlu0 %1080
        %1082 = vrot.lane.b32.xlu0 %v478, 115
        %v1083 = vpop.permute.xlu0 %1082
        %vm1084 = vcmp.lt.s32.totalorder %v486, 115
        %v1085 = vsel %vm1084, %v1081, %v1083
        %v1086 = vsel %vm1084, %v1083, %v1081
        %s1087 = scalar_lea.vmem [#allocation6], 112
        %v1088 = vld [vmem:[%s1087] sm:$0xf]
        %v1091 = vcombine.low %v1085, %v1086
        %v1093 = vunpack.c.l.s4 1983009808
        %v1094 = vunpack.c.0.s8 %v1093
        %v1095 = vlaneseq
        %v1096 = vshrl.u32 %v1095, 7
        %v1097 = vsub.s32 %v1094, %v1096
        %v1098 = vrot.slane %v1091, %v1097
        %v1100 = vmul.f32 %v1088, %v1098
        %v1101 = vadd.f32 %v1079, %v1100
        %1102 = vrot.lane.b32.xlu0 %v477, 114
        %v1103 = vpop.permute.xlu0 %1102
        %1104 = vrot.lane.b32.xlu0 %v478, 114
        %v1105 = vpop.permute.xlu0 %1104
        %vm1106 = vcmp.lt.s32.totalorder %v486, 114
        %v1107 = vsel %vm1106, %v1103, %v1105
        %v1108 = vsel %vm1106, %v1105, %v1103
        %s1109 = scalar_lea.vmem [#allocation6], 116
        %v1110 = vld [vmem:[%s1109] sm:$0xf]
        %v1113 = vcombine.low %v1107, %v1108
        %v1115 = vunpack.c.l.s4 1983009808
        %v1116 = vunpack.c.0.s8 %v1115
        %v1117 = vlaneseq
        %v1118 = vshrl.u32 %v1117, 7
        %v1119 = vsub.s32 %v1116, %v1118
        %v1120 = vrot.slane %v1113, %v1119
        %v1122 = vmul.f32 %v1110, %v1120
        %v1123 = vadd.f32 %v1101, %v1122
        %1124 = vrot.lane.b32.xlu0 %v477, 113
        %v1125 = vpop.permute.xlu0 %1124
        %1126 = vrot.lane.b32.xlu0 %v478, 113
        %v1127 = vpop.permute.xlu0 %1126
        %vm1128 = vcmp.lt.s32.totalorder %v486, 113
        %v1129 = vsel %vm1128, %v1125, %v1127
        %v1130 = vsel %vm1128, %v1127, %v1125
        %s1131 = scalar_lea.vmem [#allocation6], 120
        %v1132 = vld [vmem:[%s1131] sm:$0xf]
        %v1135 = vcombine.low %v1129, %v1130
        %v1137 = vunpack.c.l.s4 1983009808
        %v1138 = vunpack.c.0.s8 %v1137
        %v1139 = vlaneseq
        %v1140 = vshrl.u32 %v1139, 7
        %v1141 = vsub.s32 %v1138, %v1140
        %v1142 = vrot.slane %v1135, %v1141
        %v1144 = vmul.f32 %v1132, %v1142
        %v1145 = vadd.f32 %v1123, %v1144
        %1146 = vrot.lane.b32.xlu0 %v477, 112
        %v1147 = vpop.permute.xlu0 %1146
        %1148 = vrot.lane.b32.xlu0 %v478, 112
        %v1149 = vpop.permute.xlu0 %1148
        %vm1150 = vcmp.lt.s32.totalorder %v486, 112
        %v1151 = vsel %vm1150, %v1147, %v1149
        %v1152 = vsel %vm1150, %v1149, %v1147
        %s1153 = scalar_lea.vmem [#allocation6], 124
        %v1154 = vld [vmem:[%s1153] sm:$0xf]
        %v1157 = vcombine.low %v1151, %v1152
        %v1159 = vunpack.c.l.s4 1983009808
        %v1160 = vunpack.c.0.s8 %v1159
        %v1161 = vlaneseq
        %v1162 = vshrl.u32 %v1161, 7
        %v1163 = vsub.s32 %v1160, %v1162
        %v1164 = vrot.slane %v1157, %v1163
        %v1166 = vmul.f32 %v1154, %v1164
        %v1167 = vadd.f32 %v1145, %v1166
        %1168 = vrot.lane.b32.xlu0 %v477, 111
        %v1169 = vpop.permute.xlu0 %1168
        %1170 = vrot.lane.b32.xlu0 %v478, 111
        %v1171 = vpop.permute.xlu0 %1170
        %vm1172 = vcmp.lt.s32.totalorder %v486, 111
        %v1173 = vsel %vm1172, %v1169, %v1171
        %v1174 = vsel %vm1172, %v1171, %v1169
        %s1175 = scalar_lea.vmem [#allocation6], 128
        %v1176 = vld [vmem:[%s1175] sm:$0xf]
        %v1179 = vcombine.low %v1173, %v1174
        %v1181 = vunpack.c.l.s4 1983009808
        %v1182 = vunpack.c.0.s8 %v1181
        %v1183 = vlaneseq
        %v1184 = vshrl.u32 %v1183, 7
        %v1185 = vsub.s32 %v1182, %v1184
        %v1186 = vrot.slane %v1179, %v1185
        %v1188 = vmul.f32 %v1176, %v1186
        %v1189 = vadd.f32 %v1167, %v1188
        %1190 = vrot.lane.b32.xlu0 %v477, 110
        %v1191 = vpop.permute.xlu0 %1190
        %1192 = vrot.lane.b32.xlu0 %v478, 110
        %v1193 = vpop.permute.xlu0 %1192
        %vm1194 = vcmp.lt.s32.totalorder %v486, 110
        %v1195 = vsel %vm1194, %v1191, %v1193
        %v1196 = vsel %vm1194, %v1193, %v1191
        %s1197 = scalar_lea.vmem [#allocation6], 132
        %v1198 = vld [vmem:[%s1197] sm:$0xf]
        %v1201 = vcombine.low %v1195, %v1196
        %v1203 = vunpack.c.l.s4 1983009808
        %v1204 = vunpack.c.0.s8 %v1203
        %v1205 = vlaneseq
        %v1206 = vshrl.u32 %v1205, 7
        %v1207 = vsub.s32 %v1204, %v1206
        %v1208 = vrot.slane %v1201, %v1207
        %v1210 = vmul.f32 %v1198, %v1208
        %v1211 = vadd.f32 %v1189, %v1210
        %1212 = vrot.lane.b32.xlu0 %v477, 109
        %v1213 = vpop.permute.xlu0 %1212
        %1214 = vrot.lane.b32.xlu0 %v478, 109
        %v1215 = vpop.permute.xlu0 %1214
        %vm1216 = vcmp.lt.s32.totalorder %v486, 109
        %v1217 = vsel %vm1216, %v1213, %v1215
        %v1218 = vsel %vm1216, %v1215, %v1213
        %s1219 = scalar_lea.vmem [#allocation6], 136
        %v1220 = vld [vmem:[%s1219] sm:$0xf]
        %v1223 = vcombine.low %v1217, %v1218
        %v1225 = vunpack.c.l.s4 1983009808
        %v1226 = vunpack.c.0.s8 %v1225
        %v1227 = vlaneseq
        %v1228 = vshrl.u32 %v1227, 7
        %v1229 = vsub.s32 %v1226, %v1228
        %v1230 = vrot.slane %v1223, %v1229
        %v1232 = vmul.f32 %v1220, %v1230
        %v1233 = vadd.f32 %v1211, %v1232
        %1234 = vrot.lane.b32.xlu0 %v477, 99
        %v1235 = vpop.permute.xlu0 %1234
        %1236 = vrot.lane.b32.xlu0 %v478, 99
        %v1237 = vpop.permute.xlu0 %1236
        %vm1238 = vcmp.lt.s32.totalorder %v486, 99
        %v1239 = vsel %vm1238, %v1235, %v1237
        %v1240 = vsel %vm1238, %v1237, %v1235
        %s1241 = scalar_lea.vmem [#allocation6], 140
        %v1242 = vld [vmem:[%s1241] sm:$0xf]
        %v1245 = vcombine.low %v1239, %v1240
        %v1247 = vunpack.c.l.s4 1983009808
        %v1248 = vunpack.c.0.s8 %v1247
        %v1249 = vlaneseq
        %v1250 = vshrl.u32 %v1249, 7
        %v1251 = vsub.s32 %v1248, %v1250
        %v1252 = vrot.slane %v1245, %v1251
        %v1254 = vmul.f32 %v1242, %v1252
        %v1255 = vadd.f32 %v1233, %v1254
        %1256 = vrot.lane.b32.xlu0 %v477, 98
        %v1257 = vpop.permute.xlu0 %1256
        %1258 = vrot.lane.b32.xlu0 %v478, 98
        %v1259 = vpop.permute.xlu0 %1258
        %vm1260 = vcmp.lt.s32.totalorder %v486, 98
        %v1261 = vsel %vm1260, %v1257, %v1259
        %v1262 = vsel %vm1260, %v1259, %v1257
        %s1263 = scalar_lea.vmem [#allocation6], 144
        %v1264 = vld [vmem:[%s1263] sm:$0xf]
        %v1267 = vcombine.low %v1261, %v1262
        %v1269 = vunpack.c.l.s4 1983009808
        %v1270 = vunpack.c.0.s8 %v1269
        %v1271 = vlaneseq
        %v1272 = vshrl.u32 %v1271, 7
        %v1273 = vsub.s32 %v1270, %v1272
        %v1274 = vrot.slane %v1267, %v1273
        %v1276 = vmul.f32 %v1264, %v1274
        %v1277 = vadd.f32 %v1255, %v1276
        %1278 = vrot.lane.b32.xlu0 %v477, 97
        %v1279 = vpop.permute.xlu0 %1278
        %1280 = vrot.lane.b32.xlu0 %v478, 97
        %v1281 = vpop.permute.xlu0 %1280
        %vm1282 = vcmp.lt.s32.totalorder %v486, 97
        %v1283 = vsel %vm1282, %v1279, %v1281
        %v1284 = vsel %vm1282, %v1281, %v1279
        %s1285 = scalar_lea.vmem [#allocation6], 148
        %v1286 = vld [vmem:[%s1285] sm:$0xf]
        %v1289 = vcombine.low %v1283, %v1284
        %v1291 = vunpack.c.l.s4 1983009808
        %v1292 = vunpack.c.0.s8 %v1291
        %v1293 = vlaneseq
        %v1294 = vshrl.u32 %v1293, 7
        %v1295 = vsub.s32 %v1292, %v1294
        %v1296 = vrot.slane %v1289, %v1295
        %v1298 = vmul.f32 %v1286, %v1296
        %v1299 = vadd.f32 %v1277, %v1298
        %1300 = vrot.lane.b32.xlu0 %v477, 96
        %v1301 = vpop.permute.xlu0 %1300
        %1302 = vrot.lane.b32.xlu0 %v478, 96
        %v1303 = vpop.permute.xlu0 %1302
        %vm1304 = vcmp.lt.s32.totalorder %v486, 96
        %v1305 = vsel %vm1304, %v1301, %v1303
        %v1306 = vsel %vm1304, %v1303, %v1301
        %s1307 = scalar_lea.vmem [#allocation6], 152
        %v1308 = vld [vmem:[%s1307] sm:$0xf]
        %v1311 = vcombine.low %v1305, %v1306
        %v1313 = vunpack.c.l.s4 1983009808
        %v1314 = vunpack.c.0.s8 %v1313
        %v1315 = vlaneseq
        %v1316 = vshrl.u32 %v1315, 7
        %v1317 = vsub.s32 %v1314, %v1316
        %v1318 = vrot.slane %v1311, %v1317
        %v1320 = vmul.f32 %v1308, %v1318
        %v1321 = vadd.f32 %v1299, %v1320
        %1322 = vrot.lane.b32.xlu0 %v477, 95
        %v1323 = vpop.permute.xlu0 %1322
        %1324 = vrot.lane.b32.xlu0 %v478, 95
        %v1325 = vpop.permute.xlu0 %1324
        %vm1326 = vcmp.lt.s32.totalorder %v486, 95
        %v1327 = vsel %vm1326, %v1323, %v1325
        %v1328 = vsel %vm1326, %v1325, %v1323
        %s1329 = scalar_lea.vmem [#allocation6], 156
        %v1330 = vld [vmem:[%s1329] sm:$0xf]
        %v1333 = vcombine.low %v1327, %v1328
        %v1335 = vunpack.c.l.s4 1983009808
        %v1336 = vunpack.c.0.s8 %v1335
        %v1337 = vlaneseq
        %v1338 = vshrl.u32 %v1337, 7
        %v1339 = vsub.s32 %v1336, %v1338
        %v1340 = vrot.slane %v1333, %v1339
        %v1342 = vmul.f32 %v1330, %v1340
        %v1343 = vadd.f32 %v1321, %v1342
        %1344 = vrot.lane.b32.xlu0 %v477, 94
        %v1345 = vpop.permute.xlu0 %1344
        %1346 = vrot.lane.b32.xlu0 %v478, 94
        %v1347 = vpop.permute.xlu0 %1346
        %vm1348 = vcmp.lt.s32.totalorder %v486, 94
        %v1349 = vsel %vm1348, %v1345, %v1347
        %v1350 = vsel %vm1348, %v1347, %v1345
        %s1351 = scalar_lea.vmem [#allocation6], 160
        %v1352 = vld [vmem:[%s1351] sm:$0xf]
        %v1355 = vcombine.low %v1349, %v1350
        %v1357 = vunpack.c.l.s4 1983009808
        %v1358 = vunpack.c.0.s8 %v1357
        %v1359 = vlaneseq
        %v1360 = vshrl.u32 %v1359, 7
        %v1361 = vsub.s32 %v1358, %v1360
        %v1362 = vrot.slane %v1355, %v1361
        %v1364 = vmul.f32 %v1352, %v1362
        %v1365 = vadd.f32 %v1343, %v1364
        %1366 = vrot.lane.b32.xlu0 %v477, 93
        %v1367 = vpop.permute.xlu0 %1366
        %1368 = vrot.lane.b32.xlu0 %v478, 93
        %v1369 = vpop.permute.xlu0 %1368
        %vm1370 = vcmp.lt.s32.totalorder %v486, 93
        %v1371 = vsel %vm1370, %v1367, %v1369
        %v1372 = vsel %vm1370, %v1369, %v1367
        %s1373 = scalar_lea.vmem [#allocation6], 164
        %v1374 = vld [vmem:[%s1373] sm:$0xf]
        %v1377 = vcombine.low %v1371, %v1372
        %v1379 = vunpack.c.l.s4 1983009808
        %v1380 = vunpack.c.0.s8 %v1379
        %v1381 = vlaneseq
        %v1382 = vshrl.u32 %v1381, 7
        %v1383 = vsub.s32 %v1380, %v1382
        %v1384 = vrot.slane %v1377, %v1383
        %v1386 = vmul.f32 %v1374, %v1384
        %v1387 = vadd.f32 %v1365, %v1386
        %1388 = vrot.lane.b32.xlu0 %v477, 83
        %v1389 = vpop.permute.xlu0 %1388
        %1390 = vrot.lane.b32.xlu0 %v478, 83
        %v1391 = vpop.permute.xlu0 %1390
        %vm1392 = vcmp.lt.s32.totalorder %v486, 83
        %v1393 = vsel %vm1392, %v1389, %v1391
        %v1394 = vsel %vm1392, %v1391, %v1389
        %s1395 = scalar_lea.vmem [#allocation6], 168
        %v1396 = vld [vmem:[%s1395] sm:$0xf]
        %v1399 = vcombine.low %v1393, %v1394
        %v1401 = vunpack.c.l.s4 1983009808
        %v1402 = vunpack.c.0.s8 %v1401
        %v1403 = vlaneseq
        %v1404 = vshrl.u32 %v1403, 7
        %v1405 = vsub.s32 %v1402, %v1404
        %v1406 = vrot.slane %v1399, %v1405
        %v1408 = vmul.f32 %v1396, %v1406
        %v1409 = vadd.f32 %v1387, %v1408
        %1410 = vrot.lane.b32.xlu0 %v477, 82
        %v1411 = vpop.permute.xlu0 %1410
        %1412 = vrot.lane.b32.xlu0 %v478, 82
        %v1413 = vpop.permute.xlu0 %1412
        %vm1414 = vcmp.lt.s32.totalorder %v486, 82
        %v1415 = vsel %vm1414, %v1411, %v1413
        %v1416 = vsel %vm1414, %v1413, %v1411
        %s1417 = scalar_lea.vmem [#allocation6], 172
        %v1418 = vld [vmem:[%s1417] sm:$0xf]
        %v1421 = vcombine.low %v1415, %v1416
        %v1423 = vunpack.c.l.s4 1983009808
        %v1424 = vunpack.c.0.s8 %v1423
        %v1425 = vlaneseq
        %v1426 = vshrl.u32 %v1425, 7
        %v1427 = vsub.s32 %v1424, %v1426
        %v1428 = vrot.slane %v1421, %v1427
        %v1430 = vmul.f32 %v1418, %v1428
        %v1431 = vadd.f32 %v1409, %v1430
        %1432 = vrot.lane.b32.xlu0 %v477, 81
        %v1433 = vpop.permute.xlu0 %1432
        %1434 = vrot.lane.b32.xlu0 %v478, 81
        %v1435 = vpop.permute.xlu0 %1434
        %vm1436 = vcmp.lt.s32.totalorder %v486, 81
        %v1437 = vsel %vm1436, %v1433, %v1435
        %v1438 = vsel %vm1436, %v1435, %v1433
        %s1439 = scalar_lea.vmem [#allocation6], 176
        %v1440 = vld [vmem:[%s1439] sm:$0xf]
        %v1443 = vcombine.low %v1437, %v1438
        %v1445 = vunpack.c.l.s4 1983009808
        %v1446 = vunpack.c.0.s8 %v1445
        %v1447 = vlaneseq
        %v1448 = vshrl.u32 %v1447, 7
        %v1449 = vsub.s32 %v1446, %v1448
        %v1450 = vrot.slane %v1443, %v1449
        %v1452 = vmul.f32 %v1440, %v1450
        %v1453 = vadd.f32 %v1431, %v1452
        %1454 = vrot.lane.b32.xlu0 %v477, 80
        %v1455 = vpop.permute.xlu0 %1454
        %1456 = vrot.lane.b32.xlu0 %v478, 80
        %v1457 = vpop.permute.xlu0 %1456
        %vm1458 = vcmp.lt.s32.totalorder %v486, 80
        %v1459 = vsel %vm1458, %v1455, %v1457
        %v1460 = vsel %vm1458, %v1457, %v1455
        %s1461 = scalar_lea.vmem [#allocation6], 180
        %v1462 = vld [vmem:[%s1461] sm:$0xf]
        %v1465 = vcombine.low %v1459, %v1460
        %v1467 = vunpack.c.l.s4 1983009808
        %v1468 = vunpack.c.0.s8 %v1467
        %v1469 = vlaneseq
        %v1470 = vshrl.u32 %v1469, 7
        %v1471 = vsub.s32 %v1468, %v1470
        %v1472 = vrot.slane %v1465, %v1471
        %v1474 = vmul.f32 %v1462, %v1472
        %v1475 = vadd.f32 %v1453, %v1474
        %1476 = vrot.lane.b32.xlu0 %v477, 79
        %v1477 = vpop.permute.xlu0 %1476
        %1478 = vrot.lane.b32.xlu0 %v478, 79
        %v1479 = vpop.permute.xlu0 %1478
        %vm1480 = vcmp.lt.s32.totalorder %v486, 79
        %v1481 = vsel %vm1480, %v1477, %v1479
        %v1482 = vsel %vm1480, %v1479, %v1477
        %s1483 = scalar_lea.vmem [#allocation6], 184
        %v1484 = vld [vmem:[%s1483] sm:$0xf]
        %v1487 = vcombine.low %v1481, %v1482
        %v1489 = vunpack.c.l.s4 1983009808
        %v1490 = vunpack.c.0.s8 %v1489
        %v1491 = vlaneseq
        %v1492 = vshrl.u32 %v1491, 7
        %v1493 = vsub.s32 %v1490, %v1492
        %v1494 = vrot.slane %v1487, %v1493
        %v1496 = vmul.f32 %v1484, %v1494
        %v1497 = vadd.f32 %v1475, %v1496
        %1498 = vrot.lane.b32.xlu0 %v477, 78
        %v1499 = vpop.permute.xlu0 %1498
        %1500 = vrot.lane.b32.xlu0 %v478, 78
        %v1501 = vpop.permute.xlu0 %1500
        %vm1502 = vcmp.lt.s32.totalorder %v486, 78
        %v1503 = vsel %vm1502, %v1499, %v1501
        %v1504 = vsel %vm1502, %v1501, %v1499
        %s1505 = scalar_lea.vmem [#allocation6], 188
        %v1506 = vld [vmem:[%s1505] sm:$0xf]
        %v1509 = vcombine.low %v1503, %v1504
        %v1511 = vunpack.c.l.s4 1983009808
        %v1512 = vunpack.c.0.s8 %v1511
        %v1513 = vlaneseq
        %v1514 = vshrl.u32 %v1513, 7
        %v1515 = vsub.s32 %v1512, %v1514
        %v1516 = vrot.slane %v1509, %v1515
        %v1518 = vmul.f32 %v1506, %v1516
        %v1519 = vadd.f32 %v1497, %v1518
        %1520 = vrot.lane.b32.xlu0 %v477, 77
        %v1521 = vpop.permute.xlu0 %1520
        %1522 = vrot.lane.b32.xlu0 %v478, 77
        %v1523 = vpop.permute.xlu0 %1522
        %vm1524 = vcmp.lt.s32.totalorder %v486, 77
        %v1525 = vsel %vm1524, %v1521, %v1523
        %v1526 = vsel %vm1524, %v1523, %v1521
        %s1527 = scalar_lea.vmem [#allocation6], 192
        %v1528 = vld [vmem:[%s1527] sm:$0xf]
        %v1531 = vcombine.low %v1525, %v1526
        %v1533 = vunpack.c.l.s4 1983009808
        %v1534 = vunpack.c.0.s8 %v1533
        %v1535 = vlaneseq
        %v1536 = vshrl.u32 %v1535, 7
        %v1537 = vsub.s32 %v1534, %v1536
        %v1538 = vrot.slane %v1531, %v1537
        %v1540 = vmul.f32 %v1528, %v1538
        %v1541 = vadd.f32 %v1519, %v1540
        %v1543 = vrot.slane %v1541, 7
        %v1544 = vrot.slane %v1543, 2
        %v1546 = vadd.f32 %v1541, %v1544
        %v1547 = vxor.u32 %v1546, 2147483648
        %v1548 = vmul.f32 %v1547, 1.442695
        %v1549 = vpow.pop %v1548
        %v1550 = vadd.f32 %v1549, 1.0
        %v1551 = vrcp.pop %v1550
        %v1552 = vmul.f32 1.0, %v1551
        %v1555 = vunpack.c.l.s4 1966171168
        %v1556 = vunpack.c.0.s8 %v1555
        %v1557 = vlaneseq
        %v1558 = vshrl.u32 %v1557, 7
        %v1559 = vsub.s32 %v1556, %v1558
        %v1560 = vrot.slane %v1552, %v1559
        %1562 = vst.msk [vmem:[#allocation2] ss:$2 sm:$0x3] %vm429, %v1560
        %v1563 = vld [vmem:[#allocation2] ss:$2 sm:$0x3]
        %v1564 = vld [vmem:[%s230] sm:$0xff]
        %v1565 = vld [vmem:[%s230 + $0x8] sm:$0xff]
        %v1566 = vld [vmem:[%s230 + $0x10] sm:$0xff]
        %v1567 = vld [vmem:[%s230 + $0x18] sm:$0xff]
        %v1568 = vld [vmem:[%s230 + $0x20] sm:$0xff]
        %v1569 = vld [vmem:[%s230 + $0x28] sm:$0xff]
        %v1570 = vld [vmem:[%s230 + $0x30] sm:$0xff]
        %v1571 = vld [vmem:[%s230 + $0x38] sm:$0xff]
        %v1573 = vlaneseq
        %v1574 = vshrl.u32 %v1573, 7
        %v1575 = vsub.s32 0, %v1574
        %v1576 = vrot.slane %v1563, %v1575
        %v1577 = vlaneseq
        %v1578 = vshrl.u32 %v1577, 7
        %v1579 = vsub.s32 1, %v1578
        %v1580 = vrot.slane %v1563, %v1579
        %v1583 = vmul.f32 %v1564, %v1576
        %v1584 = vmul.f32 %v1565, %v1580
        %v1585 = vmul.f32 %v1566, %v1576
        %v1586 = vmul.f32 %v1567, %v1580
        %v1587 = vmul.f32 %v1568, %v1576
        %v1588 = vmul.f32 %v1569, %v1580
        %v1589 = vmul.f32 %v1570, %v1576
        %v1590 = vmul.f32 %v1571, %v1580
        %1591 = vst [vmem:[%s230] sm:$0xff] %v1583
        %1592 = vst [vmem:[%s230 + $0x8] sm:$0xff] %v1584
        %1593 = vst [vmem:[%s230 + $0x10] sm:$0xff] %v1585
        %1594 = vst [vmem:[%s230 + $0x18] sm:$0xff] %v1586
        %1595 = vst [vmem:[%s230 + $0x20] sm:$0xff] %v1587
        %1596 = vst [vmem:[%s230 + $0x28] sm:$0xff] %v1588
        %1597 = vst [vmem:[%s230 + $0x30] sm:$0xff] %v1589
        %1598 = vst [vmem:[%s230 + $0x38] sm:$0xff] %v1590
        %s1599 = sand.u32 %s119, 1
        %s1600 = scalar_lea.sflag [#allocation5], %s1599
        %s1601 = sand.u32 %s119, 1
        %s1602 = smul.addr %s1601, 64
        %s1603 = scalar_lea.vmem [#allocation8], %s1602
        // Predicated region
        $region45: #{tpu_custom_call.1} parent=35 // pred_check
          %p1604 = pneg %p129
        $region46: #{tpu_custom_call.1} parent=35 // pred_check_branch
          %1606 = sbr.rel (%p1604) target = $region48
        $region47: #{tpu_custom_call.1} parent=35 // pred_region
          %s1608 = ssub.s32 1024, 1024
          %1609 = vsyncadd %s1600, %s1608
          %s1610 = smul.addr %s22, 8
          %s1611 = smul.addr %s1610, 128
          %s1612 = scalar_lea.hbm %s4, %s1611
          %s1613 = sshll.u32 %s1603, 4
          %s1614 = int_to_ptr.vmem [resolvable:$true] %s1613
          %1619 = dma.vmem_to_hbm [thread:$0]  %s1614, 1024, %s1612, %s1600, 256, 256, 16
        $region48: #{tpu_custom_call.1} parent=35 // pred_fallthru
          _
      $region36: #{tpu_custom_call.1} parent=5 // pred_fallthru
        _
      %p1620 = scmp.le.s32.totalorder 2, %s17
      // Predicated region
      $region49: #{tpu_custom_call.1} parent=5 // pred_check
        %p1621 = pneg %p1620
      $region50: #{tpu_custom_call.1} parent=5 // pred_check_branch
        %1623 = sbr.rel (%p1621) target = $region52
      $region51: #{tpu_custom_call.1} parent=5 // pred_region
        %s1624 = ssub.s32 %s17, 2
        // Predicated region
        $region53: #{tpu_custom_call.1} parent=51 // pred_check
          %p1625 = pneg %p135
        $region54: #{tpu_custom_call.1} parent=51 // pred_check_branch
          %1627 = sbr.rel (%p1625) target = $region56
        $region55: #{tpu_custom_call.1} parent=51 // pred_region
          %s1628 = sand.u32 %s120, 1
          %s1629 = scalar_lea.sflag [#allocation5], %s1628
          %s1630 = sand.u32 %s120, 1
          %s1631 = smul.addr %s1630, 64
          %s1632 = scalar_lea.vmem [#allocation8], %s1631
          %1633 = dma.done %s1629, 1024
        $region56: #{tpu_custom_call.1} parent=51 // pred_fallthru
          _
      $region52: #{tpu_custom_call.1} parent=5 // pred_fallthru
        _
    $region6: #{tpu_custom_call.1} parent=1 // loop_footer
      %s21 = sadd.s32 1, %s17
    $region7: #{tpu_custom_call.1} parent=1 // loop_footer_branch
      %16 = sbr.rel target = $region3
    $region8: #{tpu_custom_call.1} parent=1 // loop_exit
      _
    %1634 = vsyncpa [#allocation4], 1
    %s1635 = scalar_lea.sflag [#allocation4], 1
    %1636 = vsyncpa %s1635, 1
    %1637 = vsyncpa [#allocation7], 1
    %1638 = vsyncpa [#allocation5], 1
    %s1639 = scalar_lea.sflag [#allocation5], 1
    %1640 = vsyncpa %s1639, 1

</llo_original>
